<compile_context>
chip_gen: v7x
topology: tpu7x:2x2x1
jax: 0.10.0
libtpu: 0.0.40
codegen_flags: <defaults>
</compile_context>

<pallas_src>
import math

import jax
import jax.numpy as jnp
import numpy as np
from jax.experimental import pallas as pl
from jax.experimental.pallas import tpu as pltpu

HEAD_COUNT = 4
MODEL_DIM = 32
DIM_PER_HEAD = MODEL_DIM // HEAD_COUNT


def _mha_kernel(key_ref, value_ref, query_ref, mask_ref,
                w_qkv_ref, b_qkv_ref, w_o_ref, b_o_ref,
                out_ref, attn_ref):
    bt, Lk, D = key_ref.shape
    Lq = query_ref.shape[1]
    H = HEAD_COUNT
    d = D // H

    # Flatten (batch, seq) -> rows so the projections are wide MXU matmuls.
    k2 = key_ref[...].reshape(bt * Lk, D)
    v2 = value_ref[...].reshape(bt * Lk, D)
    q2 = query_ref[...].reshape(bt * Lq, D)

    b_qkv = b_qkv_ref[...]                              # (1, 3D) f32
    w_qkv = w_qkv_ref[...]                              # (3D, 3D) bf16 block-diag

    if Lq == Lk:
        # One fused MXU push: [key | value | query] @ blockdiag(Wk, Wv, Wq*scale).
        x_cat = jnp.concatenate([k2, v2, q2], axis=-1).astype(jnp.bfloat16)
        kvq = jnp.dot(x_cat, w_qkv,
                      preferred_element_type=jnp.float32) + b_qkv
        K = kvq[:, 0:D]
        V = kvq[:, D:2 * D]
        Q = kvq[:, 2 * D:3 * D]                          # scale already folded in
    else:
        # Cross-attention fallback (different key/query lengths): 3 pushes.
        K = jnp.dot(k2.astype(jnp.bfloat16), w_qkv[0:D, 0:D],
                    preferred_element_type=jnp.float32) + b_qkv[:, 0:D]
        V = jnp.dot(v2.astype(jnp.bfloat16), w_qkv[D:2 * D, D:2 * D],
                    preferred_element_type=jnp.float32) + b_qkv[:, D:2 * D]
        Q = jnp.dot(q2.astype(jnp.bfloat16), w_qkv[2 * D:, 2 * D:],
                    preferred_element_type=jnp.float32) + b_qkv[:, 2 * D:]

    # Hoisted mask bias: one compare+select reused by every head (mask is bf16
    # in HBM to slim the DMA; compare in f32 so it lowers on all chips).
    neg = jnp.where(mask_ref[...].astype(jnp.float32) > 0.0,
                    jnp.float32(-1e18), jnp.float32(0.0))

    # Per-head attention, batched over the batch dim via 3-D einsums.
    # TODO(synk): merging the (batch, head) loop into one (bt*H)-batched einsum
    # needs a 4-D transpose that is not reliably lowered by Mosaic at d=8;
    # kept as a 4-iteration static unroll (allowed fallback per review).
    ctxs = []
    for h in range(H):                                   # static unroll, 4 iters
        lo = h * d
        Qh = Q[:, lo:lo + d].reshape(bt, Lq, d).astype(jnp.bfloat16)
        Kh = K[:, lo:lo + d].reshape(bt, Lk, d).astype(jnp.bfloat16)
        Vh = V[:, lo:lo + d].reshape(bt, Lk, d).astype(jnp.bfloat16)

        s = jnp.einsum('bqd,bkd->bqk', Qh, Kh,
                       preferred_element_type=jnp.float32) + neg
        s = s - jnp.max(s, axis=-1, keepdims=True)
        p = jnp.exp(s)
        p = p * pl.reciprocal(jnp.sum(p, axis=-1, keepdims=True), approx=True)

        if h == 0:                                       # top_attn = head 0
            attn_ref[...] = p

        # TODO(synk): nn.Dropout on attn is identity at inference; training-mode
        # stochastic dropout is not implemented here.
        ctx = jnp.einsum('bqk,bkd->bqd', p.astype(jnp.bfloat16), Vh,
                         preferred_element_type=jnp.float32)   # (bt, Lq, d)
        ctxs.append(ctx)

    # Merge heads along lanes, then ONE final-linear matmul (contraction = D).
    ctx_all = jnp.concatenate(ctxs, axis=-1).reshape(bt * Lq, D)
    out = jnp.dot(ctx_all.astype(jnp.bfloat16), w_o_ref[...],
                  preferred_element_type=jnp.float32) + b_o_ref[...]
    # TODO(synk): at production Lq*D >= 128 present `out` as a lane-dense
    # (bt, Lq*D) slab from the wrapper to avoid masked partial stores.
    out_ref[...] = out.reshape(bt, Lq, D)


def _choose_batch_tile(B, Lq, Lk, D, vmem_budget_bytes=24 * 1024 * 1024):
    """VMEM-aware batch tile: target ~512 rows per step, fit the (double
    buffered) streamed blocks plus in-kernel intermediates in a conservative
    budget (v7x has only 64 MiB physical / 32 MiB default-scoped VMEM), and
    keep >= 2 grid steps whenever B >= 2 so both v7x TensorCores get work."""
    f32, bf16 = 4, 2

    def footprint(bt):
        stream = (2 * bt * Lk * D * f32            # key, value blocks
                  + bt * Lq * D * f32              # query block
                  + bt * Lq * Lk * bf16            # mask block (bf16)
                  + bt * Lq * D * f32              # out block
                  + bt * Lq * Lk * f32)            # top_attn block
        stream *= 2                                # double buffering
        weights = (9 * D * D + D * D) * bf16 + (3 * D + D) * f32
        live = (3 * bt * max(Lq, Lk) * D * f32     # K/V/Q slabs
                + 5 * bt * Lq * Lk * f32           # neg, s, p + temporaries
                + 2 * bt * Lq * D * f32)           # ctx slab + out
        return stream + 2 * weights + live

    max_bt = B if B == 1 else B // 2               # never grid=(1,) when B >= 2
    target_rows = 512
    best = 1
    for bt in range(1, max_bt + 1):
        if B % bt != 0:
            continue
        if footprint(bt) > vmem_budget_bytes:
            break
        best = bt
        if bt * Lq >= target_rows:
            break
    return best


def multi_headed_attention(key, value, query, mask, params, batch_tile=None):
    """Returns (output (B, Lq, D), top_attn (B, Lq, Lk))."""
    B, Lk, D = key.shape
    Lq = query.shape[1]
    d = D // HEAD_COUNT
    scale = 1.0 / math.sqrt(d)
    w_stack, b_stack = params
    wk, wv, wq, wo = w_stack[0], w_stack[1], w_stack[2], w_stack[3]
    bk, bv, bq, bo = b_stack[0], b_stack[1], b_stack[2], b_stack[3]

    # Pack the projections into one block-diagonal weight (K | V | Q*scale);
    # fold the 1/sqrt(d) score scale into the Q weight/bias; ship MXU operands
    # as bf16 (accumulation and biases stay f32).
    w_qkv = jnp.zeros((3 * D, 3 * D), jnp.float32)
    w_qkv = (w_qkv.at[0:D, 0:D].set(wk)
                  .at[D:2 * D, D:2 * D].set(wv)
                  .at[2 * D:, 2 * D:].set(wq * scale)).astype(jnp.bfloat16)
    b_qkv = jnp.concatenate([bk, bv, bq * scale]).reshape(1, 3 * D)
    w_o = wo.astype(jnp.bfloat16)
    b_o = bo.reshape(1, D)
    mask_bf16 = mask.astype(jnp.bfloat16)          # 1.0 == masked; slimmer DMA

    bt = batch_tile if batch_tile is not None else _choose_batch_tile(B, Lq, Lk, D)
    assert B % bt == 0, "batch tile must divide batch"
    grid = (B // bt,)

    kernel = pl.pallas_call(
        _mha_kernel,
        out_shape=(jax.ShapeDtypeStruct((B, Lq, D), jnp.float32),
                   jax.ShapeDtypeStruct((B, Lq, Lk), jnp.float32)),
        grid_spec=pltpu.PrefetchScalarGridSpec(
            num_scalar_prefetch=0,
            grid=grid,
            in_specs=[
                pl.BlockSpec((bt, Lk, D), lambda b: (b, 0, 0)),     # key
                pl.BlockSpec((bt, Lk, D), lambda b: (b, 0, 0)),     # value
                pl.BlockSpec((bt, Lq, D), lambda b: (b, 0, 0)),     # query
                pl.BlockSpec((bt, Lq, Lk), lambda b: (b, 0, 0)),    # mask (bf16)
                pl.BlockSpec((3 * D, 3 * D), lambda b: (0, 0)),     # fused QKV W
                pl.BlockSpec((1, 3 * D), lambda b: (0, 0)),         # fused QKV b
                pl.BlockSpec((D, D), lambda b: (0, 0)),             # final W
                pl.BlockSpec((1, D), lambda b: (0, 0)),             # final b
            ],
            out_specs=[
                pl.BlockSpec((bt, Lq, D), lambda b: (b, 0, 0)),
                pl.BlockSpec((bt, Lq, Lk), lambda b: (b, 0, 0)),
            ],
        ),
        compiler_params=pltpu.CompilerParams(
            dimension_semantics=("parallel",),
            vmem_limit_bytes=32 * 1024 * 1024),
    )
    return kernel(key, value, query, mask_bf16, w_qkv, b_qkv, w_o, b_o)


def reference(key, value, query, mask, params):
    """Pure-JAX f32 replica of the PyTorch forward (no cache / rel-pos / grh / gate)."""
    w_stack, b_stack = params
    wk, wv, wq, wo = w_stack[0], w_stack[1], w_stack[2], w_stack[3]
    bk, bv, bq, bo = b_stack[0], b_stack[1], b_stack[2], b_stack[3]
    B, Lk, D = key.shape
    Lq = query.shape[1]
    H, d = HEAD_COUNT, DIM_PER_HEAD

    K = key @ wk + bk
    V = value @ wv + bv
    Q = query @ wq + bq

    def shape(x, L):
        return x.reshape(B, L, H, d).transpose(0, 2, 1, 3)   # (B, H, L, d)

    K = shape(K, Lk)
    V = shape(V, Lk)
    Q = shape(Q, Lq) / math.sqrt(d)

    scores = jnp.einsum('bhqd,bhkd->bhqk', Q, K).astype(jnp.float32)
    scores = jnp.where(mask[:, None] > 0, jnp.float32(-1e18), scores)
    attn = jax.nn.softmax(scores, axis=-1)
    ctx = jnp.einsum('bhqk,bhkd->bhqd', attn, V)
    ctx = ctx.transpose(0, 2, 1, 3).reshape(B, Lq, D)
    out = ctx @ wo + bo
    return out, attn[:, 0]


def init_params(rng):
    """Deterministic parameter init (shapes match nn.Linear(model_dim, model_dim)),
    stacked raw (unscaled) as (4, D, D) [K, V, Q, final] and (4, D) biases."""
    ks = jax.random.split(rng, 8)
    bound = 1.0 / math.sqrt(MODEL_DIM)

    def w(k):
        return jax.random.uniform(k, (MODEL_DIM, MODEL_DIM), jnp.float32,
                                  -bound, bound)

    def b(k):
        return jax.random.uniform(k, (MODEL_DIM,), jnp.float32, -bound, bound)

    w_stack = jnp.stack([w(ks[0]), w(ks[2]), w(ks[4]), w(ks[6])])  # K, V, Q, O
    b_stack = jnp.stack([b(ks[1]), b(ks[3]), b(ks[5]), b(ks[7])])
    return w_stack, b_stack


if __name__ == "__main__":
    B, L = 2, 8
    root = jax.random.PRNGKey(0)
    k_params, k_key, k_val, k_qry = jax.random.split(root, 4)

    params = init_params(k_params)
    key = jax.random.normal(k_key, (B, L, MODEL_DIM), jnp.float32)
    value = jax.random.normal(k_val, (B, L, MODEL_DIM), jnp.float32)
    query = jax.random.normal(k_qry, (B, L, MODEL_DIM), jnp.float32)

    # mask: (B, query_len, key_len), 1.0 == masked.  Mask last two keys of batch 1.
    mask = jnp.zeros((B, L, L), jnp.float32)
    mask = mask.at[1, :, -2:].set(1.0)

    out, top_attn = multi_headed_attention(key, value, query, mask, params)
    out = jax.block_until_ready(out)
    top_attn = jax.block_until_ready(top_attn)

    ref_out, ref_attn = reference(key, value, query, mask, params)

    # Tolerance reflects bf16 MXU operands (f32 accumulation) and the EUP
    # approximate reciprocal in the softmax denominator vs. the exact-f32 ref.
    np.testing.assert_allclose(np.asarray(out), np.asarray(ref_out),
                               rtol=4e-2, atol=4e-2)
    np.testing.assert_allclose(np.asarray(top_attn), np.asarray(ref_attn),
                               rtol=4e-2, atol=4e-2)

    print("KERNEL_OK")
</pallas_src>

<mosaic_0001>
module attributes {stable_mosaic.version = 11 : i64} {
  func.func @_mha_kernel(%arg0: i32, %arg1: memref<1x8x32xf32, #tpu.memory_space<vmem>>, %arg2: memref<1x8x32xf32, #tpu.memory_space<vmem>>, %arg3: memref<1x8x32xf32, #tpu.memory_space<vmem>>, %arg4: memref<1x8x8xbf16, #tpu.memory_space<vmem>>, %arg5: memref<96x96xbf16, #tpu.memory_space<vmem>>, %arg6: memref<1x96xf32, #tpu.memory_space<vmem>>, %arg7: memref<32x32xbf16, #tpu.memory_space<vmem>>, %arg8: memref<1x32xf32, #tpu.memory_space<vmem>>, %arg9: memref<1x8x32xf32, #tpu.memory_space<vmem>>, %arg10: memref<1x8x8xf32, #tpu.memory_space<vmem>>) attributes {dimension_semantics = [#tpu.dimension_semantics<parallel>], iteration_bounds = array<i64: 2>, scalar_prefetch = 0 : i64, scratch_operands = 0 : i64, tpu.core_type = #tpu.core_type<tc>, window_params = [{transform_indices = @transform_0, window_bounds = array<i64: 1, 8, 32>}, {transform_indices = @transform_1, window_bounds = array<i64: 1, 8, 32>}, {transform_indices = @transform_2, window_bounds = array<i64: 1, 8, 32>}, {transform_indices = @transform_3, window_bounds = array<i64: 1, 8, 8>}, {pipeline_mode = #tpu.pipeline_mode<synchronous>, transform_indices = @transform_4, window_bounds = array<i64: 96, 96>}, {pipeline_mode = #tpu.pipeline_mode<synchronous>, transform_indices = @transform_5, window_bounds = array<i64: 1, 96>}, {pipeline_mode = #tpu.pipeline_mode<synchronous>, transform_indices = @transform_6, window_bounds = array<i64: 32, 32>}, {pipeline_mode = #tpu.pipeline_mode<synchronous>, transform_indices = @transform_7, window_bounds = array<i64: 1, 32>}, {transform_indices = @transform_8, window_bounds = array<i64: 1, 8, 32>}, {transform_indices = @transform_9, window_bounds = array<i64: 1, 8, 8>}]} {
    %c0 = arith.constant 0 : index
    %c0_0 = arith.constant 0 : index
    %c0_1 = arith.constant 0 : index
    %0 = vector.load %arg1[%c0, %c0_0, %c0_1] : memref<1x8x32xf32, #tpu.memory_space<vmem>>, vector<1x8x32xf32>
    %1 = vector.shape_cast %0 : vector<1x8x32xf32> to vector<8x32xf32>
    %c0_2 = arith.constant 0 : index
    %c0_3 = arith.constant 0 : index
    %c0_4 = arith.constant 0 : index
    %2 = vector.load %arg2[%c0_2, %c0_3, %c0_4] : memref<1x8x32xf32, #tpu.memory_space<vmem>>, vector<1x8x32xf32>
    %3 = vector.shape_cast %2 : vector<1x8x32xf32> to vector<8x32xf32>
    %c0_5 = arith.constant 0 : index
    %c0_6 = arith.constant 0 : index
    %c0_7 = arith.constant 0 : index
    %4 = vector.load %arg3[%c0_5, %c0_6, %c0_7] : memref<1x8x32xf32, #tpu.memory_space<vmem>>, vector<1x8x32xf32>
    %5 = vector.shape_cast %4 : vector<1x8x32xf32> to vector<8x32xf32>
    %c0_8 = arith.constant 0 : index
    %c0_9 = arith.constant 0 : index
    %6 = vector.load %arg6[%c0_8, %c0_9] : memref<1x96xf32, #tpu.memory_space<vmem>>, vector<1x96xf32>
    %c0_10 = arith.constant 0 : index
    %c0_11 = arith.constant 0 : index
    %7 = vector.load %arg5[%c0_10, %c0_11] : memref<96x96xbf16, #tpu.memory_space<vmem>>, vector<96x96xbf16>
    %8 = tpu.concatenate %1, %3, %5 in 1 : vector<8x32xf32>, vector<8x32xf32>, vector<8x32xf32> -> vector<8x96xf32>
    %9 = arith.truncf %8 : vector<8x96xf32> to vector<8x96xbf16>
    %cst = arith.constant dense<0.000000e+00> : vector<8x96xf32>
    %10 = tpu.matmul %9, %7, %cst {dimension_numbers = #tpu.dot_dimension_numbers<[1], [0], [0], [1], [0, 0, 1, 1], [], []>} : vector<8x96xbf16>, vector<96x96xbf16>, vector<8x96xf32> -> vector<8x96xf32>
    %11 = vector.broadcast %6 : vector<1x96xf32> to vector<8x96xf32>
    %12 = arith.addf %10, %11 : vector<8x96xf32>
    %13 = vector.extract_strided_slice %12 {offsets = [0, 0], sizes = [8, 32], strides = [1, 1]} : vector<8x96xf32> to vector<8x32xf32>
    %14 = vector.extract_strided_slice %12 {offsets = [0, 32], sizes = [8, 32], strides = [1, 1]} : vector<8x96xf32> to vector<8x32xf32>
    %15 = vector.extract_strided_slice %12 {offsets = [0, 64], sizes = [8, 32], strides = [1, 1]} : vector<8x96xf32> to vector<8x32xf32>
    %c0_12 = arith.constant 0 : index
    %c0_13 = arith.constant 0 : index
    %c0_14 = arith.constant 0 : index
    %16 = vector.load %arg4[%c0_12, %c0_13, %c0_14] : memref<1x8x8xbf16, #tpu.memory_space<vmem>>, vector<1x8x8xbf16>
    %17 = arith.extf %16 : vector<1x8x8xbf16> to vector<1x8x8xf32>
    %cst_15 = arith.constant 0.000000e+00 : f32
    %18 = vector.broadcast %cst_15 : f32 to vector<1x8x8xf32>
    %19 = arith.cmpf ogt, %17, %18 : vector<1x8x8xf32>
    %cst_16 = arith.constant -9.99999984E+17 : f32
    %cst_17 = arith.constant 0.000000e+00 : f32
    %20 = vector.broadcast %cst_16 : f32 to vector<1x8x8xf32>
    %21 = vector.broadcast %cst_17 : f32 to vector<1x8x8xf32>
    %22 = arith.select %19, %20, %21 : vector<1x8x8xi1>, vector<1x8x8xf32>
    %23 = vector.extract_strided_slice %15 {offsets = [0, 0], sizes = [8, 8], strides = [1, 1]} : vector<8x32xf32> to vector<8x8xf32>
    %24 = vector.shape_cast %23 : vector<8x8xf32> to vector<1x8x8xf32>
    %25 = arith.truncf %24 : vector<1x8x8xf32> to vector<1x8x8xbf16>
    %26 = vector.extract_strided_slice %13 {offsets = [0, 0], sizes = [8, 8], strides = [1, 1]} : vector<8x32xf32> to vector<8x8xf32>
    %27 = vector.shape_cast %26 : vector<8x8xf32> to vector<1x8x8xf32>
    %28 = arith.truncf %27 : vector<1x8x8xf32> to vector<1x8x8xbf16>
    %29 = vector.extract_strided_slice %14 {offsets = [0, 0], sizes = [8, 8], strides = [1, 1]} : vector<8x32xf32> to vector<8x8xf32>
    %30 = vector.shape_cast %29 : vector<8x8xf32> to vector<1x8x8xf32>
    %31 = arith.truncf %30 : vector<1x8x8xf32> to vector<1x8x8xbf16>
    "tpu.trace_start"() <{level = 10 : i32, message = "bqd,bkd->bqk"}> : () -> ()
    %cst_18 = arith.constant dense<0.000000e+00> : vector<1x8x8xf32>
    %32 = tpu.matmul %25, %28, %cst_18 {dimension_numbers = #tpu.dot_dimension_numbers<[2], [2], [1], [1], [0, 0, 0, 1, 1, 1], [0], [0]>} : vector<1x8x8xbf16>, vector<1x8x8xbf16>, vector<1x8x8xf32> -> vector<1x8x8xf32>
    "tpu.trace_stop"() : () -> ()
    %33 = arith.addf %32, %22 : vector<1x8x8xf32>
    %cst_19 = arith.constant dense<0xFF800000> : vector<1x8xf32>
    %34 = vector.multi_reduction <maximumf>, %33, %cst_19 [2] : vector<1x8x8xf32> to vector<1x8xf32>
    %35 = vector.shape_cast %34 : vector<1x8xf32> to vector<1x8x1xf32>
    %36 = vector.broadcast %35 : vector<1x8x1xf32> to vector<1x8x8xf32>
    %37 = arith.subf %33, %36 : vector<1x8x8xf32>
    %38 = math.exp %37 : vector<1x8x8xf32>
    %cst_20 = arith.constant dense<0.000000e+00> : vector<1x8xf32>
    %39 = vector.multi_reduction <add>, %38, %cst_20 [2] : vector<1x8x8xf32> to vector<1x8xf32>
    %40 = vector.shape_cast %39 : vector<1x8xf32> to vector<1x8x1xf32>
    %41 = tpu.reciprocal %40 {approx = true} : vector<1x8x1xf32> -> vector<1x8x1xf32>
    %42 = vector.broadcast %41 : vector<1x8x1xf32> to vector<1x8x8xf32>
    %43 = arith.mulf %38, %42 : vector<1x8x8xf32>
    %c0_21 = arith.constant 0 : index
    %c0_22 = arith.constant 0 : index
    %c0_23 = arith.constant 0 : index
    %44 = vector.load %arg10[%c0_21, %c0_22, %c0_23] : memref<1x8x8xf32, #tpu.memory_space<vmem>>, vector<1x8x8xf32>
    tpu.vector_store %arg10[%c0_21, %c0_22, %c0_23], %43 {strides = array<i32>} : memref<1x8x8xf32, #tpu.memory_space<vmem>>, vector<1x8x8xf32>,
    %45 = arith.truncf %43 : vector<1x8x8xf32> to vector<1x8x8xbf16>
    "tpu.trace_start"() <{level = 10 : i32, message = "bqk,bkd->bqd"}> : () -> ()
    %cst_24 = arith.constant dense<0.000000e+00> : vector<1x8x8xf32>
    %46 = tpu.matmul %45, %31, %cst_24 {dimension_numbers = #tpu.dot_dimension_numbers<[2], [1], [1], [2], [0, 0, 0, 1, 1, 2], [0], [0]>} : vector<1x8x8xbf16>, vector<1x8x8xbf16>, vector<1x8x8xf32> -> vector<1x8x8xf32>
    "tpu.trace_stop"() : () -> ()
    %47 = vector.extract_strided_slice %15 {offsets = [0, 8], sizes = [8, 8], strides = [1, 1]} : vector<8x32xf32> to vector<8x8xf32>
    %48 = vector.shape_cast %47 : vector<8x8xf32> to vector<1x8x8xf32>
    %49 = arith.truncf %48 : vector<1x8x8xf32> to vector<1x8x8xbf16>
    %50 = vector.extract_strided_slice %13 {offsets = [0, 8], sizes = [8, 8], strides = [1, 1]} : vector<8x32xf32> to vector<8x8xf32>
    %51 = vector.shape_cast %50 : vector<8x8xf32> to vector<1x8x8xf32>
    %52 = arith.truncf %51 : vector<1x8x8xf32> to vector<1x8x8xbf16>
    %53 = vector.extract_strided_slice %14 {offsets = [0, 8], sizes = [8, 8], strides = [1, 1]} : vector<8x32xf32> to vector<8x8xf32>
    %54 = vector.shape_cast %53 : vector<8x8xf32> to vector<1x8x8xf32>
    %55 = arith.truncf %54 : vector<1x8x8xf32> to vector<1x8x8xbf16>
    "tpu.trace_start"() <{level = 10 : i32, message = "bqd,bkd->bqk"}> : () -> ()
    %cst_25 = arith.constant dense<0.000000e+00> : vector<1x8x8xf32>
    %56 = tpu.matmul %49, %52, %cst_25 {dimension_numbers = #tpu.dot_dimension_numbers<[2], [2], [1], [1], [0, 0, 0, 1, 1, 1], [0], [0]>} : vector<1x8x8xbf16>, vector<1x8x8xbf16>, vector<1x8x8xf32> -> vector<1x8x8xf32>
    "tpu.trace_stop"() : () -> ()
    %57 = arith.addf %56, %22 : vector<1x8x8xf32>
    %cst_26 = arith.constant dense<0xFF800000> : vector<1x8xf32>
    %58 = vector.multi_reduction <maximumf>, %57, %cst_26 [2] : vector<1x8x8xf32> to vector<1x8xf32>
    %59 = vector.shape_cast %58 : vector<1x8xf32> to vector<1x8x1xf32>
    %60 = vector.broadcast %59 : vector<1x8x1xf32> to vector<1x8x8xf32>
    %61 = arith.subf %57, %60 : vector<1x8x8xf32>
    %62 = math.exp %61 : vector<1x8x8xf32>
    %cst_27 = arith.constant dense<0.000000e+00> : vector<1x8xf32>
    %63 = vector.multi_reduction <add>, %62, %cst_27 [2] : vector<1x8x8xf32> to vector<1x8xf32>
    %64 = vector.shape_cast %63 : vector<1x8xf32> to vector<1x8x1xf32>
    %65 = tpu.reciprocal %64 {approx = true} : vector<1x8x1xf32> -> vector<1x8x1xf32>
    %66 = vector.broadcast %65 : vector<1x8x1xf32> to vector<1x8x8xf32>
    %67 = arith.mulf %62, %66 : vector<1x8x8xf32>
    %68 = arith.truncf %67 : vector<1x8x8xf32> to vector<1x8x8xbf16>
    "tpu.trace_start"() <{level = 10 : i32, message = "bqk,bkd->bqd"}> : () -> ()
    %cst_28 = arith.constant dense<0.000000e+00> : vector<1x8x8xf32>
    %69 = tpu.matmul %68, %55, %cst_28 {dimension_numbers = #tpu.dot_dimension_numbers<[2], [1], [1], [2], [0, 0, 0, 1, 1, 2], [0], [0]>} : vector<1x8x8xbf16>, vector<1x8x8xbf16>, vector<1x8x8xf32> -> vector<1x8x8xf32>
    "tpu.trace_stop"() : () -> ()
    %70 = vector.extract_strided_slice %15 {offsets = [0, 16], sizes = [8, 8], strides = [1, 1]} : vector<8x32xf32> to vector<8x8xf32>
    %71 = vector.shape_cast %70 : vector<8x8xf32> to vector<1x8x8xf32>
    %72 = arith.truncf %71 : vector<1x8x8xf32> to vector<1x8x8xbf16>
    %73 = vector.extract_strided_slice %13 {offsets = [0, 16], sizes = [8, 8], strides = [1, 1]} : vector<8x32xf32> to vector<8x8xf32>
    %74 = vector.shape_cast %73 : vector<8x8xf32> to vector<1x8x8xf32>
    %75 = arith.truncf %74 : vector<1x8x8xf32> to vector<1x8x8xbf16>
    %76 = vector.extract_strided_slice %14 {offsets = [0, 16], sizes = [8, 8], strides = [1, 1]} : vector<8x32xf32> to vector<8x8xf32>
    %77 = vector.shape_cast %76 : vector<8x8xf32> to vector<1x8x8xf32>
    %78 = arith.truncf %77 : vector<1x8x8xf32> to vector<1x8x8xbf16>
    "tpu.trace_start"() <{level = 10 : i32, message = "bqd,bkd->bqk"}> : () -> ()
    %cst_29 = arith.constant dense<0.000000e+00> : vector<1x8x8xf32>
    %79 = tpu.matmul %72, %75, %cst_29 {dimension_numbers = #tpu.dot_dimension_numbers<[2], [2], [1], [1], [0, 0, 0, 1, 1, 1], [0], [0]>} : vector<1x8x8xbf16>, vector<1x8x8xbf16>, vector<1x8x8xf32> -> vector<1x8x8xf32>
    "tpu.trace_stop"() : () -> ()
    %80 = arith.addf %79, %22 : vector<1x8x8xf32>
    %cst_30 = arith.constant dense<0xFF800000> : vector<1x8xf32>
    %81 = vector.multi_reduction <maximumf>, %80, %cst_30 [2] : vector<1x8x8xf32> to vector<1x8xf32>
    %82 = vector.shape_cast %81 : vector<1x8xf32> to vector<1x8x1xf32>
    %83 = vector.broadcast %82 : vector<1x8x1xf32> to vector<1x8x8xf32>
    %84 = arith.subf %80, %83 : vector<1x8x8xf32>
    %85 = math.exp %84 : vector<1x8x8xf32>
    %cst_31 = arith.constant dense<0.000000e+00> : vector<1x8xf32>
    %86 = vector.multi_reduction <add>, %85, %cst_31 [2] : vector<1x8x8xf32> to vector<1x8xf32>
    %87 = vector.shape_cast %86 : vector<1x8xf32> to vector<1x8x1xf32>
    %88 = tpu.reciprocal %87 {approx = true} : vector<1x8x1xf32> -> vector<1x8x1xf32>
    %89 = vector.broadcast %88 : vector<1x8x1xf32> to vector<1x8x8xf32>
    %90 = arith.mulf %85, %89 : vector<1x8x8xf32>
    %91 = arith.truncf %90 : vector<1x8x8xf32> to vector<1x8x8xbf16>
    "tpu.trace_start"() <{level = 10 : i32, message = "bqk,bkd->bqd"}> : () -> ()
    %cst_32 = arith.constant dense<0.000000e+00> : vector<1x8x8xf32>
    %92 = tpu.matmul %91, %78, %cst_32 {dimension_numbers = #tpu.dot_dimension_numbers<[2], [1], [1], [2], [0, 0, 0, 1, 1, 2], [0], [0]>} : vector<1x8x8xbf16>, vector<1x8x8xbf16>, vector<1x8x8xf32> -> vector<1x8x8xf32>
    "tpu.trace_stop"() : () -> ()
    %93 = vector.extract_strided_slice %15 {offsets = [0, 24], sizes = [8, 8], strides = [1, 1]} : vector<8x32xf32> to vector<8x8xf32>
    %94 = vector.shape_cast %93 : vector<8x8xf32> to vector<1x8x8xf32>
    %95 = arith.truncf %94 : vector<1x8x8xf32> to vector<1x8x8xbf16>
    %96 = vector.extract_strided_slice %13 {offsets = [0, 24], sizes = [8, 8], strides = [1, 1]} : vector<8x32xf32> to vector<8x8xf32>
    %97 = vector.shape_cast %96 : vector<8x8xf32> to vector<1x8x8xf32>
    %98 = arith.truncf %97 : vector<1x8x8xf32> to vector<1x8x8xbf16>
    %99 = vector.extract_strided_slice %14 {offsets = [0, 24], sizes = [8, 8], strides = [1, 1]} : vector<8x32xf32> to vector<8x8xf32>
    %100 = vector.shape_cast %99 : vector<8x8xf32> to vector<1x8x8xf32>
    %101 = arith.truncf %100 : vector<1x8x8xf32> to vector<1x8x8xbf16>
    "tpu.trace_start"() <{level = 10 : i32, message = "bqd,bkd->bqk"}> : () -> ()
    %cst_33 = arith.constant dense<0.000000e+00> : vector<1x8x8xf32>
    %102 = tpu.matmul %95, %98, %cst_33 {dimension_numbers = #tpu.dot_dimension_numbers<[2], [2], [1], [1], [0, 0, 0, 1, 1, 1], [0], [0]>} : vector<1x8x8xbf16>, vector<1x8x8xbf16>, vector<1x8x8xf32> -> vector<1x8x8xf32>
    "tpu.trace_stop"() : () -> ()
    %103 = arith.addf %102, %22 : vector<1x8x8xf32>
    %cst_34 = arith.constant dense<0xFF800000> : vector<1x8xf32>
    %104 = vector.multi_reduction <maximumf>, %103, %cst_34 [2] : vector<1x8x8xf32> to vector<1x8xf32>
    %105 = vector.shape_cast %104 : vector<1x8xf32> to vector<1x8x1xf32>
    %106 = vector.broadcast %105 : vector<1x8x1xf32> to vector<1x8x8xf32>
    %107 = arith.subf %103, %106 : vector<1x8x8xf32>
    %108 = math.exp %107 : vector<1x8x8xf32>
    %cst_35 = arith.constant dense<0.000000e+00> : vector<1x8xf32>
    %109 = vector.multi_reduction <add>, %108, %cst_35 [2] : vector<1x8x8xf32> to vector<1x8xf32>
    %110 = vector.shape_cast %109 : vector<1x8xf32> to vector<1x8x1xf32>
    %111 = tpu.reciprocal %110 {approx = true} : vector<1x8x1xf32> -> vector<1x8x1xf32>
    %112 = vector.broadcast %111 : vector<1x8x1xf32> to vector<1x8x8xf32>
    %113 = arith.mulf %108, %112 : vector<1x8x8xf32>
    %114 = arith.truncf %113 : vector<1x8x8xf32> to vector<1x8x8xbf16>
    "tpu.trace_start"() <{level = 10 : i32, message = "bqk,bkd->bqd"}> : () -> ()
    %cst_36 = arith.constant dense<0.000000e+00> : vector<1x8x8xf32>
    %115 = tpu.matmul %114, %101, %cst_36 {dimension_numbers = #tpu.dot_dimension_numbers<[2], [1], [1], [2], [0, 0, 0, 1, 1, 2], [0], [0]>} : vector<1x8x8xbf16>, vector<1x8x8xbf16>, vector<1x8x8xf32> -> vector<1x8x8xf32>
    "tpu.trace_stop"() : () -> ()
    %116 = tpu.concatenate %46, %69, %92, %115 in 2 : vector<1x8x8xf32>, vector<1x8x8xf32>, vector<1x8x8xf32>, vector<1x8x8xf32> -> vector<1x8x32xf32>
    %117 = vector.shape_cast %116 : vector<1x8x32xf32> to vector<8x32xf32>
    %118 = arith.truncf %117 : vector<8x32xf32> to vector<8x32xbf16>
    %c0_37 = arith.constant 0 : index
    %c0_38 = arith.constant 0 : index
    %119 = vector.load %arg7[%c0_37, %c0_38] : memref<32x32xbf16, #tpu.memory_space<vmem>>, vector<32x32xbf16>
    %cst_39 = arith.constant dense<0.000000e+00> : vector<8x32xf32>
    %120 = tpu.matmul %118, %119, %cst_39 {dimension_numbers = #tpu.dot_dimension_numbers<[1], [0], [0], [1], [0, 0, 1, 1], [], []>} : vector<8x32xbf16>, vector<32x32xbf16>, vector<8x32xf32> -> vector<8x32xf32>
    %c0_40 = arith.constant 0 : index
    %c0_41 = arith.constant 0 : index
    %121 = vector.load %arg8[%c0_40, %c0_41] : memref<1x32xf32, #tpu.memory_space<vmem>>, vector<1x32xf32>
    %122 = vector.broadcast %121 : vector<1x32xf32> to vector<8x32xf32>
    %123 = arith.addf %120, %122 : vector<8x32xf32>
    %124 = vector.shape_cast %123 : vector<8x32xf32> to vector<1x8x32xf32>
    %c0_42 = arith.constant 0 : index
    %c0_43 = arith.constant 0 : index
    %c0_44 = arith.constant 0 : index
    %125 = vector.load %arg9[%c0_42, %c0_43, %c0_44] : memref<1x8x32xf32, #tpu.memory_space<vmem>>, vector<1x8x32xf32>
    tpu.vector_store %arg9[%c0_42, %c0_43, %c0_44], %124 {strides = array<i32>} : memref<1x8x32xf32, #tpu.memory_space<vmem>>, vector<1x8x32xf32>,
    return
  }
  func.func @transform_0(%arg0: i32) -> (i32, i32, i32) {
    %c0_i32 = arith.constant 0 : i32
    %c0_i32_0 = arith.constant 0 : i32
    %c0_i32_1 = arith.constant 0 : i32
    return %arg0, %c0_i32, %c0_i32_0 : i32, i32, i32
  }
  func.func @transform_1(%arg0: i32) -> (i32, i32, i32) {
    %c0_i32 = arith.constant 0 : i32
    %c0_i32_0 = arith.constant 0 : i32
    %c0_i32_1 = arith.constant 0 : i32
    return %arg0, %c0_i32, %c0_i32_0 : i32, i32, i32
  }
  func.func @transform_2(%arg0: i32) -> (i32, i32, i32) {
    %c0_i32 = arith.constant 0 : i32
    %c0_i32_0 = arith.constant 0 : i32
    %c0_i32_1 = arith.constant 0 : i32
    return %arg0, %c0_i32, %c0_i32_0 : i32, i32, i32
  }
  func.func @transform_3(%arg0: i32) -> (i32, i32, i32) {
    %c0_i32 = arith.constant 0 : i32
    %c0_i32_0 = arith.constant 0 : i32
    %c0_i32_1 = arith.constant 0 : i32
    return %arg0, %c0_i32, %c0_i32_0 : i32, i32, i32
  }
  func.func @transform_4(%arg0: i32) -> (i32, i32) {
    %c0_i32 = arith.constant 0 : i32
    %c0_i32_0 = arith.constant 0 : i32
    %c0_i32_1 = arith.constant 0 : i32
    return %c0_i32, %c0_i32_0 : i32, i32
  }
  func.func @transform_5(%arg0: i32) -> (i32, i32) {
    %c0_i32 = arith.constant 0 : i32
    %c0_i32_0 = arith.constant 0 : i32
    %c0_i32_1 = arith.constant 0 : i32
    return %c0_i32, %c0_i32_0 : i32, i32
  }
  func.func @transform_6(%arg0: i32) -> (i32, i32) {
    %c0_i32 = arith.constant 0 : i32
    %c0_i32_0 = arith.constant 0 : i32
    %c0_i32_1 = arith.constant 0 : i32
    return %c0_i32, %c0_i32_0 : i32, i32
  }
  func.func @transform_7(%arg0: i32) -> (i32, i32) {
    %c0_i32 = arith.constant 0 : i32
    %c0_i32_0 = arith.constant 0 : i32
    %c0_i32_1 = arith.constant 0 : i32
    return %c0_i32, %c0_i32_0 : i32, i32
  }
  func.func @transform_8(%arg0: i32) -> (i32, i32, i32) {
    %c0_i32 = arith.constant 0 : i32
    %c0_i32_0 = arith.constant 0 : i32
    %c0_i32_1 = arith.constant 0 : i32
    return %arg0, %c0_i32, %c0_i32_0 : i32, i32, i32
  }
  func.func @transform_9(%arg0: i32) -> (i32, i32, i32) {
    %c0_i32 = arith.constant 0 : i32
    %c0_i32_0 = arith.constant 0 : i32
    %c0_i32_1 = arith.constant 0 : i32
    return %arg0, %c0_i32, %c0_i32_0 : i32, i32, i32
  }
}

</mosaic_0001>

<llo_original>
// kernel: tpu_custom_call.1
$region0: #{tpu_custom_call.1}
  #allocation0 [shape = 'u32[]', space=smem, size = 0x4, offset = 0x4, fixed_abs, tag = 'smem constant byte address 0x4 - core index']
  #allocation1 [shape = 'u32[144,128]{1,0:T(1,128)}', space=vmem, size = 0x12000, scoped, tag = 'internal scratch']
  %s0 = inlined_call_operand.hbm [shape: f32[2,8,32], index: 0, kind: input, shape index: {}]
  %s1 = inlined_call_operand.hbm [shape: f32[2,8,32], index: 1, kind: input, shape index: {}]
  %s2 = inlined_call_operand.hbm [shape: f32[2,8,32], index: 2, kind: input, shape index: {}]
  %s3 = inlined_call_operand.hbm [shape: bf16[2,8,8], index: 3, kind: input, shape index: {}]
  %s4 = inlined_call_operand.hbm [shape: bf16[96,96], index: 4, kind: input, shape index: {}]
  %s5 = inlined_call_operand.vmem [shape: f32[1,96], index: 5, kind: input, shape index: {}]
  %s6 = inlined_call_operand.vmem [shape: bf16[32,32], index: 6, kind: input, shape index: {}]
  %s7 = inlined_call_operand.vmem [shape: f32[1,32], index: 7, kind: input, shape index: {}]
  %s8 = inlined_call_operand.hbm [shape: f32[2,8,32], index: 8, kind: output, shape index: {0}]
  %s9 = inlined_call_operand.hbm [shape: f32[2,8,8], index: 9, kind: output, shape index: {1}]
  %10 = xla_tuple %s8, %s9
  %s11 = sld [smem:[#allocation0]]
  $region93: #{tpu_custom_call.1} parent=0
    _
  %s13 = ssub.s32 1, %s11
  %s14 = scalar_select 0, %s13, %s11
  $region1: #{tpu_custom_call.1} parent=0
    #allocation2 [shape = 'u8[8192]{0}', space=vmem, size = 0x2000, scoped, tag = 'input window, operand 0']
    #allocation3 [shape = 's32[2]{0}', space=sflag, size = 0x8, scoped, tag = 'scoped memory for tpu_custom_call.1']
    #allocation4 [shape = 's32[2]{0}', space=sflag, size = 0x8, scoped, tag = 'scoped memory for tpu_custom_call.1']
    #allocation5 [shape = 'u8[8192]{0}', space=vmem, size = 0x2000, scoped, tag = 'input window, operand 1']
    #allocation6 [shape = 's32[2]{0}', space=sflag, size = 0x8, scoped, tag = 'scoped memory for tpu_custom_call.1']
    #allocation7 [shape = 'u8[8192]{0}', space=vmem, size = 0x2000, scoped, tag = 'input window, operand 2']
    #allocation8 [shape = 'u8[4096]{0}', space=vmem, size = 0x1000, scoped, tag = 'input window, operand 3']
    #allocation9 [shape = 's32[2]{0}', space=sflag, size = 0x8, scoped, tag = 'scoped memory for tpu_custom_call.1']
    #allocation10 [shape = 'u8[24576]{0}', space=vmem, size = 0x6000, scoped, tag = 'input window, operand 4, single buffered']
    #allocation11 [shape = 'u8[8192]{0}', space=vmem, size = 0x2000, scoped, tag = 'output window, operand 0']
    #allocation12 [shape = 'u8[8192]{0}', space=vmem, size = 0x2000, scoped, tag = 'output window, operand 1']
    #allocation13 [shape = 's32[2]{0}', space=sflag, size = 0x8, scoped, tag = 'scoped memory for tpu_custom_call.1']
    %15 = vsyncpa [#allocation3], 0
    %s16 = scalar_lea.sflag [#allocation3], 1
    %17 = vsyncpa %s16, 0
    %18 = vsyncpa [#allocation6], 0
    %s19 = scalar_lea.sflag [#allocation6], 1
    %20 = vsyncpa %s19, 0
    %21 = vsyncpa [#allocation9], 0
    %s22 = scalar_lea.sflag [#allocation9], 1
    %23 = vsyncpa %s22, 0
    %24 = vsyncpa [#allocation4], 0
    %s25 = scalar_lea.sflag [#allocation4], 1
    %26 = vsyncpa %s25, 0
    %27 = vsyncpa [#allocation13], 0
    %s28 = scalar_lea.sflag [#allocation13], 1
    %29 = vsyncpa %s28, 0
    loop: start=0, step=1, limit=4
    $region2: #{tpu_custom_call.1} parent=1 // loop_pre_header
      _
    $region3: #{tpu_custom_call.1} parent=1 // loop_header
      %s31 = sphi 0, %s35
      %p32 = scmp.ge.s32.totalorder %s31, 4
      %s41 = sphi 0, %s43
      %s44 = sphi 0, %s41
      %s45 = sphi 0, %s44
      %s61 = sphi 0, %s45
      %s67 = sphi 0, %s69
      %s70 = sphi 0, %s67
      %s71 = sphi 0, %s70
      %s87 = sphi 0, %s71
      %s93 = sphi 0, %s95
      %s96 = sphi 0, %s93
      %s97 = sphi 0, %s96
      %s113 = sphi 0, %s97
      %s119 = sphi 0, %s121
      %s122 = sphi 0, %s119
      %s123 = sphi 0, %s122
      %s139 = sphi 0, %s123
      %s143 = sphi 0, %s143
      %s145 = sphi 0, %s143
      %s146 = sphi 0, %s145
      %s160 = sphi 0, %s146
      %s164 = sphi 0, %s164
      %s166 = sphi 0, %s164
      %s167 = sphi 0, %s166
      %s181 = sphi 0, %s167
      %s185 = sphi 0, %s185
      %s187 = sphi 0, %s185
      %s188 = sphi 0, %s187
      %s202 = sphi 0, %s188
      %s206 = sphi 0, %s206
      %s208 = sphi 0, %s206
      %s209 = sphi 0, %s208
      %s223 = sphi 0, %s209
      %s229 = sphi 0, %s231
      %s232 = sphi 0, %s229
      %s233 = sphi 0, %s232
      %s249 = sphi 0, %s233
      %s255 = sphi 0, %s257
      %s258 = sphi 0, %s255
      %s259 = sphi 0, %s258
      %s275 = sphi 0, %s259
    $region4: #{tpu_custom_call.1} parent=1 // loop_header_branch
      %34 = sbr.rel (%p32) target = $region8
    $region5: #{tpu_custom_call.1} parent=1 // loop_body
      %s36 = ssub.s32 %s31, 1
      %s37 = ssub.s32 %s31, 2
      %s38 = sadd.s32 %s31, 1
      %s39 = ssub.s32 %s31, %s38
      %p40 = scmp.eq.s32.totalorder %s39, 0
      %s42 = sadd.s32 %s41, 1
      %s43 = scalar_select %p40, %s41, %s42
      %p46 = pneg %p40
      %p47 = scmp.eq.s32.totalorder %s31, 1
      %p48 = por %p46, %p47
      %p49 = scmp.ne.s32.totalorder %s41, %s44
      %p50 = scmp.eq.s32.totalorder %s31, 0
      %p51 = por %p49, %p50
      %p52 = scmp.ne.s32.totalorder %s41, %s44
      %p53 = scmp.eq.s32.totalorder %s36, 1
      %p54 = por %p52, %p53
      %p55 = scmp.ne.s32.totalorder %s44, %s45
      %p56 = scmp.eq.s32.totalorder %s36, 0
      %p57 = por %p55, %p56
      %p58 = scmp.ne.s32.totalorder %s44, %s45
      %p59 = scmp.eq.s32.totalorder %s37, 1
      %p60 = por %p58, %p59
      %p62 = scmp.ne.s32.totalorder %s45, %s61
      %p63 = scmp.eq.s32.totalorder %s37, 0
      %p64 = por %p62, %p63
      %s65 = ssub.s32 %s31, %s38
      %p66 = scmp.eq.s32.totalorder %s65, 0
      %s68 = sadd.s32 %s67, 1
      %s69 = scalar_select %p66, %s67, %s68
      %p72 = pneg %p66
      %p73 = scmp.eq.s32.totalorder %s31, 1
      %p74 = por %p72, %p73
      %p75 = scmp.ne.s32.totalorder %s67, %s70
      %p76 = scmp.eq.s32.totalorder %s31, 0
      %p77 = por %p75, %p76
      %p78 = scmp.ne.s32.totalorder %s67, %s70
      %p79 = scmp.eq.s32.totalorder %s36, 1
      %p80 = por %p78, %p79
      %p81 = scmp.ne.s32.totalorder %s70, %s71
      %p82 = scmp.eq.s32.totalorder %s36, 0
      %p83 = por %p81, %p82
      %p84 = scmp.ne.s32.totalorder %s70, %s71
      %p85 = scmp.eq.s32.totalorder %s37, 1
      %p86 = por %p84, %p85
      %p88 = scmp.ne.s32.totalorder %s71, %s87
      %p89 = scmp.eq.s32.totalorder %s37, 0
      %p90 = por %p88, %p89
      %s91 = ssub.s32 %s31, %s38
      %p92 = scmp.eq.s32.totalorder %s91, 0
      %s94 = sadd.s32 %s93, 1
      %s95 = scalar_select %p92, %s93, %s94
      %p98 = pneg %p92
      %p99 = scmp.eq.s32.totalorder %s31, 1
      %p100 = por %p98, %p99
      %p101 = scmp.ne.s32.totalorder %s93, %s96
      %p102 = scmp.eq.s32.totalorder %s31, 0
      %p103 = por %p101, %p102
      %p104 = scmp.ne.s32.totalorder %s93, %s96
      %p105 = scmp.eq.s32.totalorder %s36, 1
      %p106 = por %p104, %p105
      %p107 = scmp.ne.s32.totalorder %s96, %s97
      %p108 = scmp.eq.s32.totalorder %s36, 0
      %p109 = por %p107, %p108
      %p110 = scmp.ne.s32.totalorder %s96, %s97
      %p111 = scmp.eq.s32.totalorder %s37, 1
      %p112 = por %p110, %p111
      %p114 = scmp.ne.s32.totalorder %s97, %s113
      %p115 = scmp.eq.s32.totalorder %s37, 0
      %p116 = por %p114, %p115
      %s117 = ssub.s32 %s31, %s38
      %p118 = scmp.eq.s32.totalorder %s117, 0
      %s120 = sadd.s32 %s119, 1
      %s121 = scalar_select %p118, %s119, %s120
      %p124 = pneg %p118
      %p125 = scmp.eq.s32.totalorder %s31, 1
      %p126 = por %p124, %p125
      %p127 = scmp.ne.s32.totalorder %s119, %s122
      %p128 = scmp.eq.s32.totalorder %s31, 0
      %p129 = por %p127, %p128
      %p130 = scmp.ne.s32.totalorder %s119, %s122
      %p131 = scmp.eq.s32.totalorder %s36, 1
      %p132 = por %p130, %p131
      %p133 = scmp.ne.s32.totalorder %s122, %s123
      %p134 = scmp.eq.s32.totalorder %s36, 0
      %p135 = por %p133, %p134
      %p136 = scmp.ne.s32.totalorder %s122, %s123
      %p137 = scmp.eq.s32.totalorder %s37, 1
      %p138 = por %p136, %p137
      %p140 = scmp.ne.s32.totalorder %s123, %s139
      %p141 = scmp.eq.s32.totalorder %s37, 0
      %p142 = por %p140, %p141
      %s144 = sadd.s32 %s143, 1
      %p147 = scmp.eq.s32.totalorder %s31, 1
      %p148 = scmp.ne.s32.totalorder %s143, %s145
      %p149 = scmp.eq.s32.totalorder %s31, 0
      %p150 = por %p148, %p149
      %p151 = scmp.ne.s32.totalorder %s143, %s145
      %p152 = scmp.eq.s32.totalorder %s36, 1
      %p153 = por %p151, %p152
      %p154 = scmp.ne.s32.totalorder %s145, %s146
      %p155 = scmp.eq.s32.totalorder %s36, 0
      %p156 = por %p154, %p155
      %p157 = scmp.ne.s32.totalorder %s145, %s146
      %p158 = scmp.eq.s32.totalorder %s37, 1
      %p159 = por %p157, %p158
      %p161 = scmp.ne.s32.totalorder %s146, %s160
      %p162 = scmp.eq.s32.totalorder %s37, 0
      %p163 = por %p161, %p162
      %s165 = sadd.s32 %s164, 1
      %p168 = scmp.eq.s32.totalorder %s31, 1
      %p169 = scmp.ne.s32.totalorder %s164, %s166
      %p170 = scmp.eq.s32.totalorder %s31, 0
      %p171 = por %p169, %p170
      %p172 = scmp.ne.s32.totalorder %s164, %s166
      %p173 = scmp.eq.s32.totalorder %s36, 1
      %p174 = por %p172, %p173
      %p175 = scmp.ne.s32.totalorder %s166, %s167
      %p176 = scmp.eq.s32.totalorder %s36, 0
      %p177 = por %p175, %p176
      %p178 = scmp.ne.s32.totalorder %s166, %s167
      %p179 = scmp.eq.s32.totalorder %s37, 1
      %p180 = por %p178, %p179
      %p182 = scmp.ne.s32.totalorder %s167, %s181
      %p183 = scmp.eq.s32.totalorder %s37, 0
      %p184 = por %p182, %p183
      %s186 = sadd.s32 %s185, 1
      %p189 = scmp.eq.s32.totalorder %s31, 1
      %p190 = scmp.ne.s32.totalorder %s185, %s187
      %p191 = scmp.eq.s32.totalorder %s31, 0
      %p192 = por %p190, %p191
      %p193 = scmp.ne.s32.totalorder %s185, %s187
      %p194 = scmp.eq.s32.totalorder %s36, 1
      %p195 = por %p193, %p194
      %p196 = scmp.ne.s32.totalorder %s187, %s188
      %p197 = scmp.eq.s32.totalorder %s36, 0
      %p198 = por %p196, %p197
      %p199 = scmp.ne.s32.totalorder %s187, %s188
      %p200 = scmp.eq.s32.totalorder %s37, 1
      %p201 = por %p199, %p200
      %p203 = scmp.ne.s32.totalorder %s188, %s202
      %p204 = scmp.eq.s32.totalorder %s37, 0
      %p205 = por %p203, %p204
      %s207 = sadd.s32 %s206, 1
      %p210 = scmp.eq.s32.totalorder %s31, 1
      %p211 = scmp.ne.s32.totalorder %s206, %s208
      %p212 = scmp.eq.s32.totalorder %s31, 0
      %p213 = por %p211, %p212
      %p214 = scmp.ne.s32.totalorder %s206, %s208
      %p215 = scmp.eq.s32.totalorder %s36, 1
      %p216 = por %p214, %p215
      %p217 = scmp.ne.s32.totalorder %s208, %s209
      %p218 = scmp.eq.s32.totalorder %s36, 0
      %p219 = por %p217, %p218
      %p220 = scmp.ne.s32.totalorder %s208, %s209
      %p221 = scmp.eq.s32.totalorder %s37, 1
      %p222 = por %p220, %p221
      %p224 = scmp.ne.s32.totalorder %s209, %s223
      %p225 = scmp.eq.s32.totalorder %s37, 0
      %p226 = por %p224, %p225
      %s227 = ssub.s32 %s31, %s38
      %p228 = scmp.eq.s32.totalorder %s227, 0
      %s230 = sadd.s32 %s229, 1
      %s231 = scalar_select %p228, %s229, %s230
      %p234 = pneg %p228
      %p235 = scmp.eq.s32.totalorder %s31, 1
      %p236 = por %p234, %p235
      %p237 = scmp.ne.s32.totalorder %s229, %s232
      %p238 = scmp.eq.s32.totalorder %s31, 0
      %p239 = por %p237, %p238
      %p240 = scmp.ne.s32.totalorder %s229, %s232
      %p241 = scmp.eq.s32.totalorder %s36, 1
      %p242 = por %p240, %p241
      %p243 = scmp.ne.s32.totalorder %s232, %s233
      %p244 = scmp.eq.s32.totalorder %s36, 0
      %p245 = por %p243, %p244
      %p246 = scmp.ne.s32.totalorder %s232, %s233
      %p247 = scmp.eq.s32.totalorder %s37, 1
      %p248 = por %p246, %p247
      %p250 = scmp.ne.s32.totalorder %s233, %s249
      %p251 = scmp.eq.s32.totalorder %s37, 0
      %p252 = por %p250, %p251
      %s253 = ssub.s32 %s31, %s38
      %p254 = scmp.eq.s32.totalorder %s253, 0
      %s256 = sadd.s32 %s255, 1
      %s257 = scalar_select %p254, %s255, %s256
      %p260 = pneg %p254
      %p261 = scmp.eq.s32.totalorder %s31, 1
      %p262 = por %p260, %p261
      %p263 = scmp.ne.s32.totalorder %s255, %s258
      %p264 = scmp.eq.s32.totalorder %s31, 0
      %p265 = por %p263, %p264
      %p266 = scmp.ne.s32.totalorder %s255, %s258
      %p267 = scmp.eq.s32.totalorder %s36, 1
      %p268 = por %p266, %p267
      %p269 = scmp.ne.s32.totalorder %s258, %s259
      %p270 = scmp.eq.s32.totalorder %s36, 0
      %p271 = por %p269, %p270
      %p272 = scmp.ne.s32.totalorder %s258, %s259
      %p273 = scmp.eq.s32.totalorder %s37, 1
      %p274 = por %p272, %p273
      %p276 = scmp.ne.s32.totalorder %s259, %s275
      %p277 = scmp.eq.s32.totalorder %s37, 0
      %p278 = por %p276, %p277
      %p279 = scmp.le.s32.totalorder 1, %s31
      %p280 = scmp.lt.s32.totalorder %s31, 3
      %p281 = pnand %p279, %p280
      %p282 = pneg %p281
      // Predicated region
      $region9: #{tpu_custom_call.1} parent=5 // pred_check
        _
      $region10: #{tpu_custom_call.1} parent=5 // pred_check_branch
        %284 = sbr.rel (%p281) target = $region12
      $region11: #{tpu_custom_call.1} parent=5 // pred_region
        %s285 = ssub.s32 %s31, 1
        // Predicated region
        $region13: #{tpu_custom_call.1} parent=11 // pred_check
          %p286 = pneg %p156
        $region14: #{tpu_custom_call.1} parent=11 // pred_check_branch
          %288 = sbr.rel (%p286) target = $region16
        $region15: #{tpu_custom_call.1} parent=11 // pred_region
          %s290 = ssub.s32 768, 768
          %291 = vsyncadd [#allocation9], %s290
          %s292 = sshll.u32 [#allocation10], 4
          %s293 = int_to_ptr.vmem [resolvable:$true] %s292
          %298 = dma.hbm_to_vmem [thread:$0]  %s4, 768, %s293, [#allocation9], 64, 64, 4
        $region16: #{tpu_custom_call.1} parent=11 // pred_fallthru
          _
        // Predicated region
        $region17: #{tpu_custom_call.1} parent=11 // pred_check
          %p299 = pneg %p177
        $region18: #{tpu_custom_call.1} parent=11 // pred_check_branch
          %301 = sbr.rel (%p299) target = $region20
        $region19: #{tpu_custom_call.1} parent=11 // pred_region
          _
        $region20: #{tpu_custom_call.1} parent=11 // pred_fallthru
          _
        // Predicated region
        $region21: #{tpu_custom_call.1} parent=11 // pred_check
          %p302 = pneg %p198
        $region22: #{tpu_custom_call.1} parent=11 // pred_check_branch
          %304 = sbr.rel (%p302) target = $region24
        $region23: #{tpu_custom_call.1} parent=11 // pred_region
          _
        $region24: #{tpu_custom_call.1} parent=11 // pred_fallthru
          _
        // Predicated region
        $region25: #{tpu_custom_call.1} parent=11 // pred_check
          %p305 = pneg %p219
        $region26: #{tpu_custom_call.1} parent=11 // pred_check_branch
          %307 = sbr.rel (%p305) target = $region28
        $region27: #{tpu_custom_call.1} parent=11 // pred_region
          _
        $region28: #{tpu_custom_call.1} parent=11 // pred_fallthru
          _
      $region12: #{tpu_custom_call.1} parent=5 // pred_fallthru
        _
      %p308 = scmp.lt.s32.totalorder %s31, 2
      // Predicated region
      $region29: #{tpu_custom_call.1} parent=5 // pred_check
        %p309 = pneg %p308
      $region30: #{tpu_custom_call.1} parent=5 // pred_check_branch
        %311 = sbr.rel (%p309) target = $region32
      $region31: #{tpu_custom_call.1} parent=5 // pred_region
        // Predicated region
        $region33: #{tpu_custom_call.1} parent=31 // pred_check
          %p312 = pneg %p51
        $region34: #{tpu_custom_call.1} parent=31 // pred_check_branch
          %314 = sbr.rel (%p312) target = $region36
        $region35: #{tpu_custom_call.1} parent=31 // pred_region
          %s315 = sand.u32 %s41, 1
          %s316 = scalar_lea.sflag [#allocation3], %s315
          %s317 = sand.u32 %s41, 1
          %s318 = smul.addr %s317, 8
          %s319 = scalar_lea.vmem [#allocation2], %s318
          %s321 = ssub.s32 128, 128
          %322 = vsyncadd %s316, %s321
          %s323 = smul.addr %s31, 128
          %s324 = scalar_lea.hbm %s0, %s323
          %s326 = sshll.u32 %s319, 4
          %s327 = int_to_ptr.vmem [resolvable:$true] %s326
          %329 = dma.hbm_to_vmem [thread:$0]  %s324, 128, %s327, %s316
        $region36: #{tpu_custom_call.1} parent=31 // pred_fallthru
          _
        // Predicated region
        $region37: #{tpu_custom_call.1} parent=31 // pred_check
          %p330 = pneg %p77
        $region38: #{tpu_custom_call.1} parent=31 // pred_check_branch
          %332 = sbr.rel (%p330) target = $region40
        $region39: #{tpu_custom_call.1} parent=31 // pred_region
          %s333 = sand.u32 %s31, 1
          %s334 = scalar_lea.sflag [#allocation6], %s333
          %s335 = sand.u32 %s67, 1
          %s336 = smul.addr %s335, 8
          %s337 = scalar_lea.vmem [#allocation5], %s336
          %s339 = ssub.s32 128, 128
          %340 = vsyncadd %s334, %s339
          %s341 = smul.addr %s31, 128
          %s342 = scalar_lea.hbm %s1, %s341
          %s344 = sshll.u32 %s337, 4
          %s345 = int_to_ptr.vmem [resolvable:$true] %s344
          %347 = dma.hbm_to_vmem [thread:$0]  %s342, 128, %s345, %s334
        $region40: #{tpu_custom_call.1} parent=31 // pred_fallthru
          _
        // Predicated region
        $region41: #{tpu_custom_call.1} parent=31 // pred_check
          %p348 = pneg %p103
        $region42: #{tpu_custom_call.1} parent=31 // pred_check_branch
          %350 = sbr.rel (%p348) target = $region44
        $region43: #{tpu_custom_call.1} parent=31 // pred_region
          %s351 = sand.u32 %s31, 1
          %s352 = scalar_lea.sflag [#allocation6], %s351
          %s353 = sand.u32 %s93, 1
          %s354 = smul.addr %s353, 8
          %s355 = scalar_lea.vmem [#allocation7], %s354
          %s357 = ssub.s32 128, 128
          %358 = vsyncadd %s352, %s357
          %s359 = smul.addr %s31, 128
          %s360 = scalar_lea.hbm %s2, %s359
          %s362 = sshll.u32 %s355, 4
          %s363 = int_to_ptr.vmem [resolvable:$true] %s362
          %365 = dma.hbm_to_vmem [thread:$0]  %s360, 128, %s363, %s352
        $region44: #{tpu_custom_call.1} parent=31 // pred_fallthru
          _
        // Predicated region
        $region45: #{tpu_custom_call.1} parent=31 // pred_check
          %p366 = pneg %p129
        $region46: #{tpu_custom_call.1} parent=31 // pred_check_branch
          %368 = sbr.rel (%p366) target = $region48
        $region47: #{tpu_custom_call.1} parent=31 // pred_region
          %s369 = sand.u32 %s31, 1
          %s370 = scalar_lea.sflag [#allocation9], %s369
          %s371 = sand.u32 %s119, 1
          %s372 = smul.addr %s371, 4
          %s373 = scalar_lea.vmem [#allocation8], %s372
          %s375 = ssub.s32 64, 64
          %376 = vsyncadd %s370, %s375
          %s377 = smul.addr %s31, 64
          %s378 = scalar_lea.hbm %s3, %s377
          %s380 = sshll.u32 %s373, 4
          %s381 = int_to_ptr.vmem [resolvable:$true] %s380
          %383 = dma.hbm_to_vmem [thread:$0]  %s378, 64, %s381, %s370
        $region48: #{tpu_custom_call.1} parent=31 // pred_fallthru
          _
      $region32: #{tpu_custom_call.1} parent=5 // pred_fallthru
        _
      %p384 = scmp.le.s32.totalorder 1, %s31
      %p385 = scmp.lt.s32.totalorder %s31, 3
      %p386 = pnand %p384, %p385
      %p387 = pneg %p386
      // Predicated region
      $region49: #{tpu_custom_call.1} parent=5 // pred_check
        _
      $region50: #{tpu_custom_call.1} parent=5 // pred_check_branch
        %389 = sbr.rel (%p386) target = $region52
      $region51: #{tpu_custom_call.1} parent=5 // pred_region
        %s390 = ssub.s32 %s31, 1
        %s391 = sand.u32 %s44, 1
        %s392 = scalar_lea.sflag [#allocation3], %s391
        %s393 = sand.u32 %s44, 1
        %s394 = smul.addr %s393, 8
        %s395 = scalar_lea.vmem [#allocation2], %s394
        // Predicated region
        $region53: #{tpu_custom_call.1} parent=51 // pred_check
          %p396 = pneg %p57
        $region54: #{tpu_custom_call.1} parent=51 // pred_check_branch
          %398 = sbr.rel (%p396) target = $region56
        $region55: #{tpu_custom_call.1} parent=51 // pred_region
          %399 = dma.done %s392, 128
        $region56: #{tpu_custom_call.1} parent=51 // pred_fallthru
          _
        %s400 = sand.u32 %s36, 1
        %s401 = scalar_lea.sflag [#allocation6], %s400
        %s402 = sand.u32 %s70, 1
        %s403 = smul.addr %s402, 8
        %s404 = scalar_lea.vmem [#allocation5], %s403
        // Predicated region
        $region57: #{tpu_custom_call.1} parent=51 // pred_check
          %p405 = pneg %p83
        $region58: #{tpu_custom_call.1} parent=51 // pred_check_branch
          %407 = sbr.rel (%p405) target = $region60
        $region59: #{tpu_custom_call.1} parent=51 // pred_region
          %408 = dma.done %s401, 128
        $region60: #{tpu_custom_call.1} parent=51 // pred_fallthru
          _
        %s409 = sand.u32 %s36, 1
        %s410 = scalar_lea.sflag [#allocation6], %s409
        %s411 = sand.u32 %s96, 1
        %s412 = smul.addr %s411, 8
        %s413 = scalar_lea.vmem [#allocation7], %s412
        // Predicated region
        $region61: #{tpu_custom_call.1} parent=51 // pred_check
          %p414 = pneg %p109
        $region62: #{tpu_custom_call.1} parent=51 // pred_check_branch
          %416 = sbr.rel (%p414) target = $region64
        $region63: #{tpu_custom_call.1} parent=51 // pred_region
          %417 = dma.done %s410, 128
        $region64: #{tpu_custom_call.1} parent=51 // pred_fallthru
          _
        %s418 = sand.u32 %s36, 1
        %s419 = scalar_lea.sflag [#allocation9], %s418
        %s420 = sand.u32 %s122, 1
        %s421 = smul.addr %s420, 4
        %s422 = scalar_lea.vmem [#allocation8], %s421
        // Predicated region
        $region65: #{tpu_custom_call.1} parent=51 // pred_check
          %p423 = pneg %p135
        $region66: #{tpu_custom_call.1} parent=51 // pred_check_branch
          %425 = sbr.rel (%p423) target = $region68
        $region67: #{tpu_custom_call.1} parent=51 // pred_region
          %426 = dma.done %s419, 64
        $region68: #{tpu_custom_call.1} parent=51 // pred_fallthru
          _
        // Predicated region
        $region69: #{tpu_custom_call.1} parent=51 // pred_check
          %p427 = pneg %p156
        $region70: #{tpu_custom_call.1} parent=51 // pred_check_branch
          %429 = sbr.rel (%p427) target = $region72
        $region71: #{tpu_custom_call.1} parent=51 // pred_region
          %430 = dma.done [#allocation9], 768
        $region72: #{tpu_custom_call.1} parent=51 // pred_fallthru
          _
        %s431 = sand.u32 %s44, 1
        %s432 = scalar_lea.sflag [#allocation3], %s431
        %s433 = sand.u32 %s44, 1
        %s434 = smul.addr %s433, 8
        %s435 = scalar_lea.vmem [#allocation2], %s434
        %p436 = pneg %p57
        %p437 = pneg %p54
        %s438 = sand.u32 %s36, 1
        %s439 = scalar_lea.sflag [#allocation6], %s438
        %s440 = sand.u32 %s70, 1
        %s441 = smul.addr %s440, 8
        %s442 = scalar_lea.vmem [#allocation5], %s441
        %p443 = pneg %p83
        %p444 = pneg %p80
        %s445 = sand.u32 %s36, 1
        %s446 = scalar_lea.sflag [#allocation6], %s445
        %s447 = sand.u32 %s96, 1
        %s448 = smul.addr %s447, 8
        %s449 = scalar_lea.vmem [#allocation7], %s448
        %p450 = pneg %p109
        %p451 = pneg %p106
        %s452 = sand.u32 %s36, 1
        %s453 = scalar_lea.sflag [#allocation9], %s452
        %s454 = sand.u32 %s122, 1
        %s455 = smul.addr %s454, 4
        %s456 = scalar_lea.vmem [#allocation8], %s455
        %p457 = pneg %p135
        %p458 = pneg %p132
        %p459 = pneg %p156
        %p460 = pneg %p153
        %p461 = pneg %p177
        %p462 = pneg %p174
        %p463 = pneg %p198
        %p464 = pneg %p195
        %p465 = pneg %p219
        %p466 = pneg %p216
        %p467 = pneg %p245
        %p468 = pneg %p242
        %s469 = sand.u32 %s232, 1
        %s470 = scalar_lea.sflag [#allocation4], %s469
        %s471 = sand.u32 %s232, 1
        %s472 = smul.addr %s471, 8
        %s473 = scalar_lea.vmem [#allocation11], %s472
        %p474 = pneg %p271
        %p475 = pneg %p268
        %s476 = sand.u32 %s258, 1
        %s477 = scalar_lea.sflag [#allocation13], %s476
        %s478 = sand.u32 %s258, 1
        %s479 = smul.addr %s478, 8
        %s480 = scalar_lea.vmem [#allocation12], %s479
        %v482 = vld [vmem:[%s395] sm:$0xff]
        %v483 = vld [vmem:[%s404] sm:$0xff]
        %v484 = vld [vmem:[%s413] sm:$0xff]
        %v485 = vld [vmem:[%s5] sm:$0x1]
        %v486 = vld [vmem:[#allocation10] sm:$0xf]
        %v487 = vld [vmem:[#allocation10 + $0x4] sm:$0xf]
        %v488 = vld [vmem:[#allocation10 + $0x8] sm:$0xf]
        %v489 = vld [vmem:[#allocation10 + $0xc] sm:$0xf]
        %v490 = vld [vmem:[#allocation10 + $0x10] sm:$0xf]
        %v491 = vld [vmem:[#allocation10 + $0x14] sm:$0xf]
        %v492 = vld [vmem:[#allocation10 + $0x18] sm:$0xf]
        %v493 = vld [vmem:[#allocation10 + $0x1c] sm:$0xf]
        %v494 = vld [vmem:[#allocation10 + $0x20] sm:$0xf]
        %v495 = vld [vmem:[#allocation10 + $0x24] sm:$0xf]
        %v496 = vld [vmem:[#allocation10 + $0x28] sm:$0xf]
        %v497 = vld [vmem:[#allocation10 + $0x2c] sm:$0xf]
        %499 = vrot.lane.b32.xlu0 %v483, 32
        %v500 = vpop.permute.xlu0 %499
        %503 = vrot.lane.b32.xlu0 %v484, 64
        %v504 = vpop.permute.xlu0 %503
        %vm506 = vcmask 261120
        %v507 = vsel %vm506, %v482, %v500
        %vm508 = vcmask 523264
        %v509 = vsel %vm508, %v507, %v504
        %v510 = vpack.c.bf16 %v509, %v509
        %v512 = vlaneseq
        %v513 = vshrl.u32 %v512, 7
        %v514 = vsub.s32 0, %v513
        %v515 = vrot.slane %v485, %v514
        %v529 = vunpack.c.l.b16 %v486
        %v530 = vunpack.c.l.b16 %v487
        %v531 = vunpack.c.l.b16 %v488
        %v532 = vunpack.c.l.b16 %v489
        %v533 = vunpack.c.l.b16 %v490
        %v534 = vunpack.c.l.b16 %v491
        %v535 = vunpack.c.l.b16 %v492
        %v536 = vunpack.c.l.b16 %v493
        %v537 = vunpack.c.l.b16 %v494
        %v538 = vunpack.c.l.b16 %v495
        %v539 = vunpack.c.l.b16 %v496
        %v540 = vunpack.c.l.b16 %v497
        %v541 = vpack.c.b16 %v530, %v529
        %v542 = vpack.c.b16 %v532, %v531
        %v543 = vpack.c.b16 %v534, %v533
        %v544 = vpack.c.b16 %v536, %v535
        %v545 = vpack.c.b16 %v538, %v537
        %v546 = vpack.c.b16 %v540, %v539
        %vm553 = vcmask 785408
        %v555 = vsel %vm553, %v510, 0
        %557 = vmatprep.subr.bf16.mxu0 0
        %558 = vmatpush1.bf16.msra.mxu0 %v541
        %559 = vmatprep.subr.bf16.mxu0 0
        %560 = vmatpush1.bf16.msra.mxu0 %v542
        %561 = vmatprep.subr.bf16.mxu0 0
        %562 = vmatpush1.bf16.msra.mxu0 %v543
        %563 = vmatprep.subr.bf16.mxu0 0
        %564 = vmatpush1.bf16.msra.mxu0 %v544
        %565 = vmatprep.subr.bf16.mxu0 0
        %566 = vmatpush1.bf16.msra.mxu0 %v545
        %567 = vmatprep.subr.bf16.mxu0 0
        %568 = vmatpush1.bf16.msra.mxu0 %v546
        %569 = vmatprep.subr.bf16.mxu0 0
        %570 = vmatpush1.bf16.msra.mxu0 0
        %571 = vmatprep.subr.bf16.mxu0 0
        %572 = vmatpush1.bf16.msra.mxu0 0
        %573 = vmatprep.subr.bf16.mxu0 0
        %574 = vmatpush1.bf16.msra.mxu0 0
        %575 = vmatprep.subr.bf16.mxu0 0
        %576 = vmatpush1.bf16.msra.mxu0 0
        %577 = vmatprep.subr.bf16.mxu0 0
        %578 = vmatpush1.bf16.msra.mxu0 0
        %579 = vmatprep.subr.bf16.mxu0 0
        %580 = vmatpush1.bf16.msra.mxu0 0
        %581 = vmatprep.subr.bf16.mxu0 0
        %582 = vmatpush1.bf16.msra.mxu0 0
        %583 = vmatprep.subr.bf16.mxu0 0
        %584 = vmatpush1.bf16.msra.mxu0 0
        %585 = vmatprep.subr.bf16.mxu0 0
        %586 = vmatpush1.bf16.msra.mxu0 0
        %587 = vmatprep.subr.bf16.mxu0 0
        %588 = vmatpush1.bf16.msra.mxu0 0
        %589 = vmatprep.mubr.bf16.mxu0 0
        %590 = vmatmul.mubr.bf16.gmra.mrb[0].mxu0 %v555
        %v591 = vpop.f32.mrb[0].mxu0
        %v592 = vadd.f32 %v515, %v591
        %v593 = vpop.f32.mrb[0].mxu0
        %v594 = vpop.f32.mrb[0].mxu0
        %v595 = vpop.f32.mrb[0].mxu0
        %596 = vdwg.mxu0
        %v597 = vld [vmem:[%s422] sm:$0xf]
        %v598 = vunpack.c.l.bf16 %v597
        %vm599 = vcmp.gt.f32.partialorder %v598, 0.0
        %v600 = vsel %vm599, -1e+18, 0.0
        %v601 = vpack.c.bf16 %v592, %v592
        %603 = vrot.lane.b32.xlu0 %v601, 64
        %v604 = vpop.permute.xlu0 %603
        %vm605 = vcmask 64512
        %v607 = vsel %vm605, %v604, 0
        %v610 = vsel %vm605, %v601, 0
        %612 = vmatprep.subr.bf16.mxu0 0
        %613 = vmatpush1.bf16.xpose.msra.mxu0 %v610
        %614 = vmatprep.subr.bf16.mxu0 0
        %615 = vmatpush1.bf16.xpose.msra.mxu0 0
        %616 = vmatprep.subr.bf16.mxu0 0
        %617 = vmatpush1.bf16.xpose.msra.mxu0 0
        %618 = vmatprep.subr.bf16.mxu0 0
        %619 = vmatpush1.bf16.xpose.msra.mxu0 0
        %620 = vmatprep.subr.bf16.mxu0 0
        %621 = vmatpush1.bf16.xpose.msra.mxu0 0
        %622 = vmatprep.subr.bf16.mxu0 0
        %623 = vmatpush1.bf16.xpose.msra.mxu0 0
        %624 = vmatprep.subr.bf16.mxu0 0
        %625 = vmatpush1.bf16.xpose.msra.mxu0 0
        %626 = vmatprep.subr.bf16.mxu0 0
        %627 = vmatpush1.bf16.xpose.msra.mxu0 0
        %628 = vmatprep.subr.bf16.mxu0 0
        %629 = vmatpush1.bf16.xpose.msra.mxu0 0
        %630 = vmatprep.subr.bf16.mxu0 0
        %631 = vmatpush1.bf16.xpose.msra.mxu0 0
        %632 = vmatprep.subr.bf16.mxu0 0
        %633 = vmatpush1.bf16.xpose.msra.mxu0 0
        %634 = vmatprep.subr.bf16.mxu0 0
        %635 = vmatpush1.bf16.xpose.msra.mxu0 0
        %636 = vmatprep.subr.bf16.mxu0 0
        %637 = vmatpush1.bf16.xpose.msra.mxu0 0
        %638 = vmatprep.subr.bf16.mxu0 0
        %639 = vmatpush1.bf16.xpose.msra.mxu0 0
        %640 = vmatprep.subr.bf16.mxu0 0
        %641 = vmatpush1.bf16.xpose.msra.mxu0 0
        %642 = vmatprep.subr.bf16.mxu0 0
        %643 = vmatpush1.bf16.xpose.msra.mxu0 0
        %644 = vmatprep.mubr.bf16.mxu0 0
        %645 = vmatmul.mubr.bf16.gmra.mrb[0].mxu0 %v607
        %v646 = vpop.f32.mrb[0].mxu0
        %v647 = vadd.f32 %v600, %v646
        %v648 = vpop.f32.mrb[0].mxu0
        %v649 = vpop.f32.mrb[0].mxu0
        %v650 = vpop.f32.mrb[0].mxu0
        %651 = vdwg.mxu0
        %v652 = vsel %vm605, %v647, -inf
        %653 = vmax.xlane.f32.xlu0 %v652
        %v654 = vpop.xlane.xlu0 %653
        %v655 = vsub.f32 %v647, %v654
        %v656 = vmul.f32 %v655, 1.442695
        %v657 = vpow.pop %v656
        %v658 = vsel %vm605, %v657, 0.0
        %659 = vadd.xlane.f32.xlu0 %v658
        %v660 = vpop.xlane.xlu0 %659
        %v661 = vrcp.pop %v660
        %v662 = vmul.f32 %v657, %v661
        %663 = vst.msk [vmem:[%s480] sm:$0xff] %vm605, %v662
        %v664 = vpack.c.bf16 %v662, %v662
        %665 = vrot.lane.b32.xlu0 %v601, 96
        %v666 = vpop.permute.xlu0 %665
        %v668 = vsel %vm605, %v664, 0
        %vm670 = vcmask 1043456
        %v672 = vsel %vm670, %v666, 0
        %674 = vmatprep.subr.bf16.mxu0 0
        %675 = vmatpush1.bf16.msra.mxu0 %v672
        %676 = vmatprep.subr.bf16.mxu0 0
        %677 = vmatpush1.bf16.msra.mxu0 0
        %678 = vmatprep.subr.bf16.mxu0 0
        %679 = vmatpush1.bf16.msra.mxu0 0
        %680 = vmatprep.subr.bf16.mxu0 0
        %681 = vmatpush1.bf16.msra.mxu0 0
        %682 = vmatprep.subr.bf16.mxu0 0
        %683 = vmatpush1.bf16.msra.mxu0 0
        %684 = vmatprep.subr.bf16.mxu0 0
        %685 = vmatpush1.bf16.msra.mxu0 0
        %686 = vmatprep.subr.bf16.mxu0 0
        %687 = vmatpush1.bf16.msra.mxu0 0
        %688 = vmatprep.subr.bf16.mxu0 0
        %689 = vmatpush1.bf16.msra.mxu0 0
        %690 = vmatprep.subr.bf16.mxu0 0
        %691 = vmatpush1.bf16.msra.mxu0 0
        %692 = vmatprep.subr.bf16.mxu0 0
        %693 = vmatpush1.bf16.msra.mxu0 0
        %694 = vmatprep.subr.bf16.mxu0 0
        %695 = vmatpush1.bf16.msra.mxu0 0
        %696 = vmatprep.subr.bf16.mxu0 0
        %697 = vmatpush1.bf16.msra.mxu0 0
        %698 = vmatprep.subr.bf16.mxu0 0
        %699 = vmatpush1.bf16.msra.mxu0 0
        %700 = vmatprep.subr.bf16.mxu0 0
        %701 = vmatpush1.bf16.msra.mxu0 0
        %702 = vmatprep.subr.bf16.mxu0 0
        %703 = vmatpush1.bf16.msra.mxu0 0
        %704 = vmatprep.subr.bf16.mxu0 0
        %705 = vmatpush1.bf16.msra.mxu0 0
        %706 = vmatprep.mubr.bf16.mxu0 0
        %707 = vmatmul.mubr.bf16.gmra.mrb[0].mxu0 %v668
        %v708 = vpop.f32.mrb[0].mxu0
        %v709 = vadd.f32 0.0, %v708
        %v710 = vpop.f32.mrb[0].mxu0
        %v711 = vpop.f32.mrb[0].mxu0
        %v712 = vpop.f32.mrb[0].mxu0
        %713 = vdwg.mxu0
        %714 = vrot.lane.b32.xlu0 %v601, 56
        %v715 = vpop.permute.xlu0 %714
        %716 = vrot.lane.b32.xlu0 %v601, 120
        %v717 = vpop.permute.xlu0 %716
        %v719 = vsel %vm605, %v715, 0
        %v722 = vsel %vm605, %v717, 0
        %724 = vmatprep.subr.bf16.mxu0 0
        %725 = vmatpush1.bf16.xpose.msra.mxu0 %v722
        %726 = vmatprep.subr.bf16.mxu0 0
        %727 = vmatpush1.bf16.xpose.msra.mxu0 0
        %728 = vmatprep.subr.bf16.mxu0 0
        %729 = vmatpush1.bf16.xpose.msra.mxu0 0
        %730 = vmatprep.subr.bf16.mxu0 0
        %731 = vmatpush1.bf16.xpose.msra.mxu0 0
        %732 = vmatprep.subr.bf16.mxu0 0
        %733 = vmatpush1.bf16.xpose.msra.mxu0 0
        %734 = vmatprep.subr.bf16.mxu0 0
        %735 = vmatpush1.bf16.xpose.msra.mxu0 0
        %736 = vmatprep.subr.bf16.mxu0 0
        %737 = vmatpush1.bf16.xpose.msra.mxu0 0
        %738 = vmatprep.subr.bf16.mxu0 0
        %739 = vmatpush1.bf16.xpose.msra.mxu0 0
        %740 = vmatprep.subr.bf16.mxu0 0
        %741 = vmatpush1.bf16.xpose.msra.mxu0 0
        %742 = vmatprep.subr.bf16.mxu0 0
        %743 = vmatpush1.bf16.xpose.msra.mxu0 0
        %744 = vmatprep.subr.bf16.mxu0 0
        %745 = vmatpush1.bf16.xpose.msra.mxu0 0
        %746 = vmatprep.subr.bf16.mxu0 0
        %747 = vmatpush1.bf16.xpose.msra.mxu0 0
        %748 = vmatprep.subr.bf16.mxu0 0
        %749 = vmatpush1.bf16.xpose.msra.mxu0 0
        %750 = vmatprep.subr.bf16.mxu0 0
        %751 = vmatpush1.bf16.xpose.msra.mxu0 0
        %752 = vmatprep.subr.bf16.mxu0 0
        %753 = vmatpush1.bf16.xpose.msra.mxu0 0
        %754 = vmatprep.subr.bf16.mxu0 0
        %755 = vmatpush1.bf16.xpose.msra.mxu0 0
        %756 = vmatprep.mubr.bf16.mxu0 0
        %757 = vmatmul.mubr.bf16.gmra.mrb[0].mxu0 %v719
        %v758 = vpop.f32.mrb[0].mxu0
        %v759 = vadd.f32 %v600, %v758
        %v760 = vpop.f32.mrb[0].mxu0
        %v761 = vpop.f32.mrb[0].mxu0
        %v762 = vpop.f32.mrb[0].mxu0
        %763 = vdwg.mxu0
        %v764 = vsel %vm605, %v759, -inf
        %765 = vmax.xlane.f32.xlu0 %v764
        %v766 = vpop.xlane.xlu0 %765
        %v767 = vsub.f32 %v759, %v766
        %v768 = vmul.f32 %v767, 1.442695
        %v769 = vpow.pop %v768
        %v770 = vsel %vm605, %v769, 0.0
        %771 = vadd.xlane.f32.xlu0 %v770
        %v772 = vpop.xlane.xlu0 %771
        %v773 = vrcp.pop %v772
        %v774 = vmul.f32 %v769, %v773
        %v775 = vpack.c.bf16 %v774, %v774
        %776 = vrot.lane.b32.xlu0 %v601, 88
        %v777 = vpop.permute.xlu0 %776
        %v779 = vsel %vm605, %v775, 0
        %v782 = vsel %vm670, %v777, 0
        %784 = vmatprep.subr.bf16.mxu0 0
        %785 = vmatpush1.bf16.msra.mxu0 %v782
        %786 = vmatprep.subr.bf16.mxu0 0
        %787 = vmatpush1.bf16.msra.mxu0 0
        %788 = vmatprep.subr.bf16.mxu0 0
        %789 = vmatpush1.bf16.msra.mxu0 0
        %790 = vmatprep.subr.bf16.mxu0 0
        %791 = vmatpush1.bf16.msra.mxu0 0
        %792 = vmatprep.subr.bf16.mxu0 0
        %793 = vmatpush1.bf16.msra.mxu0 0
        %794 = vmatprep.subr.bf16.mxu0 0
        %795 = vmatpush1.bf16.msra.mxu0 0
        %796 = vmatprep.subr.bf16.mxu0 0
        %797 = vmatpush1.bf16.msra.mxu0 0
        %798 = vmatprep.subr.bf16.mxu0 0
        %799 = vmatpush1.bf16.msra.mxu0 0
        %800 = vmatprep.subr.bf16.mxu0 0
        %801 = vmatpush1.bf16.msra.mxu0 0
        %802 = vmatprep.subr.bf16.mxu0 0
        %803 = vmatpush1.bf16.msra.mxu0 0
        %804 = vmatprep.subr.bf16.mxu0 0
        %805 = vmatpush1.bf16.msra.mxu0 0
        %806 = vmatprep.subr.bf16.mxu0 0
        %807 = vmatpush1.bf16.msra.mxu0 0
        %808 = vmatprep.subr.bf16.mxu0 0
        %809 = vmatpush1.bf16.msra.mxu0 0
        %810 = vmatprep.subr.bf16.mxu0 0
        %811 = vmatpush1.bf16.msra.mxu0 0
        %812 = vmatprep.subr.bf16.mxu0 0
        %813 = vmatpush1.bf16.msra.mxu0 0
        %814 = vmatprep.subr.bf16.mxu0 0
        %815 = vmatpush1.bf16.msra.mxu0 0
        %816 = vmatprep.mubr.bf16.mxu0 0
        %817 = vmatmul.mubr.bf16.gmra.mrb[0].mxu0 %v779
        %v818 = vpop.f32.mrb[0].mxu0
        %v819 = vadd.f32 0.0, %v818
        %v820 = vpop.f32.mrb[0].mxu0
        %v821 = vpop.f32.mrb[0].mxu0
        %v822 = vpop.f32.mrb[0].mxu0
        %823 = vdwg.mxu0
        %824 = vrot.lane.b32.xlu0 %v601, 48
        %v825 = vpop.permute.xlu0 %824
        %826 = vrot.lane.b32.xlu0 %v601, 112
        %v827 = vpop.permute.xlu0 %826
        %v829 = vsel %vm605, %v825, 0
        %v832 = vsel %vm605, %v827, 0
        %834 = vmatprep.subr.bf16.mxu0 0
        %835 = vmatpush1.bf16.xpose.msra.mxu0 %v832
        %836 = vmatprep.subr.bf16.mxu0 0
        %837 = vmatpush1.bf16.xpose.msra.mxu0 0
        %838 = vmatprep.subr.bf16.mxu0 0
        %839 = vmatpush1.bf16.xpose.msra.mxu0 0
        %840 = vmatprep.subr.bf16.mxu0 0
        %841 = vmatpush1.bf16.xpose.msra.mxu0 0
        %842 = vmatprep.subr.bf16.mxu0 0
        %843 = vmatpush1.bf16.xpose.msra.mxu0 0
        %844 = vmatprep.subr.bf16.mxu0 0
        %845 = vmatpush1.bf16.xpose.msra.mxu0 0
        %846 = vmatprep.subr.bf16.mxu0 0
        %847 = vmatpush1.bf16.xpose.msra.mxu0 0
        %848 = vmatprep.subr.bf16.mxu0 0
        %849 = vmatpush1.bf16.xpose.msra.mxu0 0
        %850 = vmatprep.subr.bf16.mxu0 0
        %851 = vmatpush1.bf16.xpose.msra.mxu0 0
        %852 = vmatprep.subr.bf16.mxu0 0
        %853 = vmatpush1.bf16.xpose.msra.mxu0 0
        %854 = vmatprep.subr.bf16.mxu0 0
        %855 = vmatpush1.bf16.xpose.msra.mxu0 0
        %856 = vmatprep.subr.bf16.mxu0 0
        %857 = vmatpush1.bf16.xpose.msra.mxu0 0
        %858 = vmatprep.subr.bf16.mxu0 0
        %859 = vmatpush1.bf16.xpose.msra.mxu0 0
        %860 = vmatprep.subr.bf16.mxu0 0
        %861 = vmatpush1.bf16.xpose.msra.mxu0 0
        %862 = vmatprep.subr.bf16.mxu0 0
        %863 = vmatpush1.bf16.xpose.msra.mxu0 0
        %864 = vmatprep.subr.bf16.mxu0 0
        %865 = vmatpush1.bf16.xpose.msra.mxu0 0
        %866 = vmatprep.mubr.bf16.mxu0 0
        %867 = vmatmul.mubr.bf16.gmra.mrb[0].mxu0 %v829
        %v868 = vpop.f32.mrb[0].mxu0
        %v869 = vadd.f32 %v600, %v868
        %v870 = vpop.f32.mrb[0].mxu0
        %v871 = vpop.f32.mrb[0].mxu0
        %v872 = vpop.f32.mrb[0].mxu0
        %873 = vdwg.mxu0
        %v874 = vsel %vm605, %v869, -inf
        %875 = vmax.xlane.f32.xlu0 %v874
        %v876 = vpop.xlane.xlu0 %875
        %v877 = vsub.f32 %v869, %v876
        %v878 = vmul.f32 %v877, 1.442695
        %v879 = vpow.pop %v878
        %v880 = vsel %vm605, %v879, 0.0
        %881 = vadd.xlane.f32.xlu0 %v880
        %v882 = vpop.xlane.xlu0 %881
        %v883 = vrcp.pop %v882
        %v884 = vmul.f32 %v879, %v883
        %v885 = vpack.c.bf16 %v884, %v884
        %886 = vrot.lane.b32.xlu0 %v601, 80
        %v887 = vpop.permute.xlu0 %886
        %v889 = vsel %vm605, %v885, 0
        %v892 = vsel %vm670, %v887, 0
        %894 = vmatprep.subr.bf16.mxu0 0
        %895 = vmatpush1.bf16.msra.mxu0 %v892
        %896 = vmatprep.subr.bf16.mxu0 0
        %897 = vmatpush1.bf16.msra.mxu0 0
        %898 = vmatprep.subr.bf16.mxu0 0
        %899 = vmatpush1.bf16.msra.mxu0 0
        %900 = vmatprep.subr.bf16.mxu0 0
        %901 = vmatpush1.bf16.msra.mxu0 0
        %902 = vmatprep.subr.bf16.mxu0 0
        %903 = vmatpush1.bf16.msra.mxu0 0
        %904 = vmatprep.subr.bf16.mxu0 0
        %905 = vmatpush1.bf16.msra.mxu0 0
        %906 = vmatprep.subr.bf16.mxu0 0
        %907 = vmatpush1.bf16.msra.mxu0 0
        %908 = vmatprep.subr.bf16.mxu0 0
        %909 = vmatpush1.bf16.msra.mxu0 0
        %910 = vmatprep.subr.bf16.mxu0 0
        %911 = vmatpush1.bf16.msra.mxu0 0
        %912 = vmatprep.subr.bf16.mxu0 0
        %913 = vmatpush1.bf16.msra.mxu0 0
        %914 = vmatprep.subr.bf16.mxu0 0
        %915 = vmatpush1.bf16.msra.mxu0 0
        %916 = vmatprep.subr.bf16.mxu0 0
        %917 = vmatpush1.bf16.msra.mxu0 0
        %918 = vmatprep.subr.bf16.mxu0 0
        %919 = vmatpush1.bf16.msra.mxu0 0
        %920 = vmatprep.subr.bf16.mxu0 0
        %921 = vmatpush1.bf16.msra.mxu0 0
        %922 = vmatprep.subr.bf16.mxu0 0
        %923 = vmatpush1.bf16.msra.mxu0 0
        %924 = vmatprep.subr.bf16.mxu0 0
        %925 = vmatpush1.bf16.msra.mxu0 0
        %926 = vmatprep.mubr.bf16.mxu0 0
        %927 = vmatmul.mubr.bf16.gmra.mrb[0].mxu0 %v889
        %v928 = vpop.f32.mrb[0].mxu0
        %v929 = vadd.f32 0.0, %v928
        %v930 = vpop.f32.mrb[0].mxu0
        %v931 = vpop.f32.mrb[0].mxu0
        %v932 = vpop.f32.mrb[0].mxu0
        %933 = vdwg.mxu0
        %934 = vrot.lane.b32.xlu0 %v601, 40
        %v935 = vpop.permute.xlu0 %934
        %936 = vrot.lane.b32.xlu0 %v601, 104
        %v937 = vpop.permute.xlu0 %936
        %v939 = vsel %vm605, %v935, 0
        %v942 = vsel %vm605, %v937, 0
        %944 = vmatprep.subr.bf16.mxu0 0
        %945 = vmatpush1.bf16.xpose.msra.mxu0 %v942
        %946 = vmatprep.subr.bf16.mxu0 0
        %947 = vmatpush1.bf16.xpose.msra.mxu0 0
        %948 = vmatprep.subr.bf16.mxu0 0
        %949 = vmatpush1.bf16.xpose.msra.mxu0 0
        %950 = vmatprep.subr.bf16.mxu0 0
        %951 = vmatpush1.bf16.xpose.msra.mxu0 0
        %952 = vmatprep.subr.bf16.mxu0 0
        %953 = vmatpush1.bf16.xpose.msra.mxu0 0
        %954 = vmatprep.subr.bf16.mxu0 0
        %955 = vmatpush1.bf16.xpose.msra.mxu0 0
        %956 = vmatprep.subr.bf16.mxu0 0
        %957 = vmatpush1.bf16.xpose.msra.mxu0 0
        %958 = vmatprep.subr.bf16.mxu0 0
        %959 = vmatpush1.bf16.xpose.msra.mxu0 0
        %960 = vmatprep.subr.bf16.mxu0 0
        %961 = vmatpush1.bf16.xpose.msra.mxu0 0
        %962 = vmatprep.subr.bf16.mxu0 0
        %963 = vmatpush1.bf16.xpose.msra.mxu0 0
        %964 = vmatprep.subr.bf16.mxu0 0
        %965 = vmatpush1.bf16.xpose.msra.mxu0 0
        %966 = vmatprep.subr.bf16.mxu0 0
        %967 = vmatpush1.bf16.xpose.msra.mxu0 0
        %968 = vmatprep.subr.bf16.mxu0 0
        %969 = vmatpush1.bf16.xpose.msra.mxu0 0
        %970 = vmatprep.subr.bf16.mxu0 0
        %971 = vmatpush1.bf16.xpose.msra.mxu0 0
        %972 = vmatprep.subr.bf16.mxu0 0
        %973 = vmatpush1.bf16.xpose.msra.mxu0 0
        %974 = vmatprep.subr.bf16.mxu0 0
        %975 = vmatpush1.bf16.xpose.msra.mxu0 0
        %976 = vmatprep.mubr.bf16.mxu0 0
        %977 = vmatmul.mubr.bf16.gmra.mrb[0].mxu0 %v939
        %v978 = vpop.f32.mrb[0].mxu0
        %v979 = vadd.f32 %v600, %v978
        %v980 = vpop.f32.mrb[0].mxu0
        %v981 = vpop.f32.mrb[0].mxu0
        %v982 = vpop.f32.mrb[0].mxu0
        %983 = vdwg.mxu0
        %v984 = vsel %vm605, %v979, -inf
        %985 = vmax.xlane.f32.xlu0 %v984
        %v986 = vpop.xlane.xlu0 %985
        %v987 = vsub.f32 %v979, %v986
        %v988 = vmul.f32 %v987, 1.442695
        %v989 = vpow.pop %v988
        %v990 = vsel %vm605, %v989, 0.0
        %991 = vadd.xlane.f32.xlu0 %v990
        %v992 = vpop.xlane.xlu0 %991
        %v993 = vrcp.pop %v992
        %v994 = vmul.f32 %v989, %v993
        %v995 = vpack.c.bf16 %v994, %v994
        %996 = vrot.lane.b32.xlu0 %v601, 72
        %v997 = vpop.permute.xlu0 %996
        %v999 = vsel %vm605, %v995, 0
        %v1002 = vsel %vm670, %v997, 0
        %1004 = vmatprep.subr.bf16.mxu0 0
        %1005 = vmatpush1.bf16.msra.mxu0 %v1002
        %1006 = vmatprep.subr.bf16.mxu0 0
        %1007 = vmatpush1.bf16.msra.mxu0 0
        %1008 = vmatprep.subr.bf16.mxu0 0
        %1009 = vmatpush1.bf16.msra.mxu0 0
        %1010 = vmatprep.subr.bf16.mxu0 0
        %1011 = vmatpush1.bf16.msra.mxu0 0
        %1012 = vmatprep.subr.bf16.mxu0 0
        %1013 = vmatpush1.bf16.msra.mxu0 0
        %1014 = vmatprep.subr.bf16.mxu0 0
        %1015 = vmatpush1.bf16.msra.mxu0 0
        %1016 = vmatprep.subr.bf16.mxu0 0
        %1017 = vmatpush1.bf16.msra.mxu0 0
        %1018 = vmatprep.subr.bf16.mxu0 0
        %1019 = vmatpush1.bf16.msra.mxu0 0
        %1020 = vmatprep.subr.bf16.mxu0 0
        %1021 = vmatpush1.bf16.msra.mxu0 0
        %1022 = vmatprep.subr.bf16.mxu0 0
        %1023 = vmatpush1.bf16.msra.mxu0 0
        %1024 = vmatprep.subr.bf16.mxu0 0
        %1025 = vmatpush1.bf16.msra.mxu0 0
        %1026 = vmatprep.subr.bf16.mxu0 0
        %1027 = vmatpush1.bf16.msra.mxu0 0
        %1028 = vmatprep.subr.bf16.mxu0 0
        %1029 = vmatpush1.bf16.msra.mxu0 0
        %1030 = vmatprep.subr.bf16.mxu0 0
        %1031 = vmatpush1.bf16.msra.mxu0 0
        %1032 = vmatprep.subr.bf16.mxu0 0
        %1033 = vmatpush1.bf16.msra.mxu0 0
        %1034 = vmatprep.subr.bf16.mxu0 0
        %1035 = vmatpush1.bf16.msra.mxu0 0
        %1036 = vmatprep.mubr.bf16.mxu0 0
        %1037 = vmatmul.mubr.bf16.gmra.mrb[0].mxu0 %v999
        %v1038 = vpop.f32.mrb[0].mxu0
        %v1039 = vadd.f32 0.0, %v1038
        %v1040 = vpop.f32.mrb[0].mxu0
        %v1041 = vpop.f32.mrb[0].mxu0
        %v1042 = vpop.f32.mrb[0].mxu0
        %1043 = vdwg.mxu0
        %1045 = vrot.lane.b32.xlu0 %v819, 8
        %v1046 = vpop.permute.xlu0 %1045
        %1049 = vrot.lane.b32.xlu0 %v929, 16
        %v1050 = vpop.permute.xlu0 %1049
        %1053 = vrot.lane.b32.xlu0 %v1039, 24
        %v1054 = vpop.permute.xlu0 %1053
        %v1056 = vsel %vm605, %v709, %v1046
        %vm1057 = vcmask 130048
        %v1058 = vsel %vm1057, %v1056, %v1050
        %vm1059 = vcmask 195584
        %v1060 = vsel %vm1059, %v1058, %v1054
        %v1061 = vpack.c.bf16 %v1060, %v1060
        %v1062 = vld [vmem:[%s6] sm:$0xf]
        %v1063 = vld [vmem:[%s6 + $0x4] sm:$0xf]
        %v1064 = vld [vmem:[%s6 + $0x8] sm:$0xf]
        %v1065 = vld [vmem:[%s6 + $0xc] sm:$0xf]
        %v1066 = vld [vmem:[%s7] sm:$0x1]
        %v1068 = vlaneseq
        %v1069 = vshrl.u32 %v1068, 7
        %v1070 = vsub.s32 0, %v1069
        %v1071 = vrot.slane %v1066, %v1070
        %v1077 = vunpack.c.l.b16 %v1062
        %v1078 = vunpack.c.l.b16 %v1063
        %v1079 = vunpack.c.l.b16 %v1064
        %v1080 = vunpack.c.l.b16 %v1065
        %v1081 = vpack.c.b16 %v1078, %v1077
        %v1082 = vpack.c.b16 %v1080, %v1079
        %v1086 = vsel %vm506, %v1061, 0
        %1088 = vmatprep.subr.bf16.mxu0 0
        %1089 = vmatpush1.bf16.msra.mxu0 %v1081
        %1090 = vmatprep.subr.bf16.mxu0 0
        %1091 = vmatpush1.bf16.msra.mxu0 %v1082
        %1092 = vmatprep.subr.bf16.mxu0 0
        %1093 = vmatpush1.bf16.msra.mxu0 0
        %1094 = vmatprep.subr.bf16.mxu0 0
        %1095 = vmatpush1.bf16.msra.mxu0 0
        %1096 = vmatprep.subr.bf16.mxu0 0
        %1097 = vmatpush1.bf16.msra.mxu0 0
        %1098 = vmatprep.subr.bf16.mxu0 0
        %1099 = vmatpush1.bf16.msra.mxu0 0
        %1100 = vmatprep.subr.bf16.mxu0 0
        %1101 = vmatpush1.bf16.msra.mxu0 0
        %1102 = vmatprep.subr.bf16.mxu0 0
        %1103 = vmatpush1.bf16.msra.mxu0 0
        %1104 = vmatprep.subr.bf16.mxu0 0
        %1105 = vmatpush1.bf16.msra.mxu0 0
        %1106 = vmatprep.subr.bf16.mxu0 0
        %1107 = vmatpush1.bf16.msra.mxu0 0
        %1108 = vmatprep.subr.bf16.mxu0 0
        %1109 = vmatpush1.bf16.msra.mxu0 0
        %1110 = vmatprep.subr.bf16.mxu0 0
        %1111 = vmatpush1.bf16.msra.mxu0 0
        %1112 = vmatprep.subr.bf16.mxu0 0
        %1113 = vmatpush1.bf16.msra.mxu0 0
        %1114 = vmatprep.subr.bf16.mxu0 0
        %1115 = vmatpush1.bf16.msra.mxu0 0
        %1116 = vmatprep.subr.bf16.mxu0 0
        %1117 = vmatpush1.bf16.msra.mxu0 0
        %1118 = vmatprep.subr.bf16.mxu0 0
        %1119 = vmatpush1.bf16.msra.mxu0 0
        %1120 = vmatprep.mubr.bf16.mxu0 0
        %1121 = vmatmul.mubr.bf16.gmra.mrb[0].mxu0 %v1086
        %v1122 = vpop.f32.mrb[0].mxu0
        %v1123 = vadd.f32 %v1071, %v1122
        %v1124 = vpop.f32.mrb[0].mxu0
        %v1125 = vpop.f32.mrb[0].mxu0
        %v1126 = vpop.f32.mrb[0].mxu0
        %1127 = vdwg.mxu0
        %1128 = vst.msk [vmem:[%s473] sm:$0xff] %vm506, %v1123
        %s1129 = sand.u32 %s232, 1
        %s1130 = scalar_lea.sflag [#allocation4], %s1129
        %s1131 = sand.u32 %s232, 1
        %s1132 = smul.addr %s1131, 8
        %s1133 = scalar_lea.vmem [#allocation11], %s1132
        %s1134 = sand.u32 %s258, 1
        %s1135 = scalar_lea.sflag [#allocation13], %s1134
        %s1136 = sand.u32 %s258, 1
        %s1137 = smul.addr %s1136, 8
        %s1138 = scalar_lea.vmem [#allocation12], %s1137
        // Predicated region
        $region73: #{tpu_custom_call.1} parent=51 // pred_check
          %p1139 = pneg %p242
        $region74: #{tpu_custom_call.1} parent=51 // pred_check_branch
          %1141 = sbr.rel (%p1139) target = $region76
        $region75: #{tpu_custom_call.1} parent=51 // pred_region
          %s1143 = ssub.s32 128, 128
          %1144 = vsyncadd %s1130, %s1143
          %s1145 = smul.addr %s36, 128
          %s1146 = scalar_lea.hbm %s8, %s1145
          %s1148 = sshll.u32 %s1133, 4
          %s1149 = int_to_ptr.vmem [resolvable:$true] %s1148
          %1151 = dma.vmem_to_hbm [thread:$0]  %s1149, 128, %s1146, %s1130
        $region76: #{tpu_custom_call.1} parent=51 // pred_fallthru
          _
        // Predicated region
        $region77: #{tpu_custom_call.1} parent=51 // pred_check
          %p1152 = pneg %p268
        $region78: #{tpu_custom_call.1} parent=51 // pred_check_branch
          %1154 = sbr.rel (%p1152) target = $region80
        $region79: #{tpu_custom_call.1} parent=51 // pred_region
          %s1156 = ssub.s32 128, 128
          %1157 = vsyncadd %s1135, %s1156
          %s1158 = smul.addr %s36, 128
          %s1159 = scalar_lea.hbm %s9, %s1158
          %s1161 = sshll.u32 %s1138, 4
          %s1162 = int_to_ptr.vmem [resolvable:$true] %s1161
          %1164 = dma.vmem_to_hbm [thread:$0]  %s1162, 128, %s1159, %s1135
        $region80: #{tpu_custom_call.1} parent=51 // pred_fallthru
          _
      $region52: #{tpu_custom_call.1} parent=5 // pred_fallthru
        _
      %p1165 = scmp.le.s32.totalorder 2, %s31
      // Predicated region
      $region81: #{tpu_custom_call.1} parent=5 // pred_check
        %p1166 = pneg %p1165
      $region82: #{tpu_custom_call.1} parent=5 // pred_check_branch
        %1168 = sbr.rel (%p1166) target = $region84
      $region83: #{tpu_custom_call.1} parent=5 // pred_region
        %s1169 = ssub.s32 %s31, 2
        // Predicated region
        $region85: #{tpu_custom_call.1} parent=83 // pred_check
          %p1170 = pneg %p248
        $region86: #{tpu_custom_call.1} parent=83 // pred_check_branch
          %1172 = sbr.rel (%p1170) target = $region88
        $region87: #{tpu_custom_call.1} parent=83 // pred_region
          %s1173 = sand.u32 %s233, 1
          %s1174 = scalar_lea.sflag [#allocation4], %s1173
          %s1175 = sand.u32 %s233, 1
          %s1176 = smul.addr %s1175, 8
          %s1177 = scalar_lea.vmem [#allocation11], %s1176
          %1178 = dma.done %s1174, 128
        $region88: #{tpu_custom_call.1} parent=83 // pred_fallthru
          _
        // Predicated region
        $region89: #{tpu_custom_call.1} parent=83 // pred_check
          %p1179 = pneg %p274
        $region90: #{tpu_custom_call.1} parent=83 // pred_check_branch
          %1181 = sbr.rel (%p1179) target = $region92
        $region91: #{tpu_custom_call.1} parent=83 // pred_region
          %s1182 = sand.u32 %s259, 1
          %s1183 = scalar_lea.sflag [#allocation13], %s1182
          %s1184 = sand.u32 %s259, 1
          %s1185 = smul.addr %s1184, 8
          %s1186 = scalar_lea.vmem [#allocation12], %s1185
          %1187 = dma.done %s1183, 128
        $region92: #{tpu_custom_call.1} parent=83 // pred_fallthru
          _
      $region84: #{tpu_custom_call.1} parent=5 // pred_fallthru
        _
    $region6: #{tpu_custom_call.1} parent=1 // loop_footer
      %s35 = sadd.s32 1, %s31
    $region7: #{tpu_custom_call.1} parent=1 // loop_footer_branch
      %30 = sbr.rel target = $region3
    $region8: #{tpu_custom_call.1} parent=1 // loop_exit
      _
    %1188 = vsyncpa [#allocation3], 1
    %s1189 = scalar_lea.sflag [#allocation3], 1
    %1190 = vsyncpa %s1189, 1
    %1191 = vsyncpa [#allocation6], 1
    %s1192 = scalar_lea.sflag [#allocation6], 1
    %1193 = vsyncpa %s1192, 1
    %1194 = vsyncpa [#allocation9], 1
    %s1195 = scalar_lea.sflag [#allocation9], 1
    %1196 = vsyncpa %s1195, 1
    %1197 = vsyncpa [#allocation4], 1
    %s1198 = scalar_lea.sflag [#allocation4], 1
    %1199 = vsyncpa %s1198, 1
    %1200 = vsyncpa [#allocation13], 1
    %s1201 = scalar_lea.sflag [#allocation13], 1
    %1202 = vsyncpa %s1201, 1

</llo_original>
